<compile_context>
chip_gen: v7x
topology: tpu7x:2x2x1
jax: 0.10.0
libtpu: 0.0.40
codegen_flags: <defaults>
</compile_context>

<pallas_src>
import functools

import jax
import jax.numpy as jnp
from jax import lax
from jax.experimental import pallas as pl
from jax.experimental.pallas import tpu as pltpu

MXU_DTYPE = jnp.bfloat16  # MXU input dtype; accumulation stays f32
NEG_BIG = -1e30           # additive mask bias for dropped / padded keys


# ----------------------------- Pallas kernel ---------------------------------
def _attention_kernel(x_ref, ctx_ref, bias_ref,
                      wq_ref, wkv_ref, wo_ref, bo_ref,
                      o_ref,
                      q_sc, m_sc, l_sc, acc_sc, o_sc,
                      *, heads, dim_head, scale):
    cd = MXU_DTYPE
    inner = heads * dim_head
    kv_step = pl.program_id(1)
    n_kv = pl.num_programs(1)

    # ---- once per batch element: q projection + state init -------------------
    @pl.when(kv_step == 0)
    def _init():
        x = x_ref[0]                                              # (n, dq)
        q = jnp.dot(x.astype(cd), wq_ref[...],
                    preferred_element_type=jnp.float32) * scale   # scale folded in
        q_sc[...] = q.astype(cd)
        m_sc[...] = jnp.full_like(m_sc, -jnp.inf)
        l_sc[...] = jnp.zeros_like(l_sc)
        acc_sc[...] = jnp.zeros_like(acc_sc)

    # ---- per KV tile: project k/v for this tile only --------------------------
    ctx_t = ctx_ref[0, 0]                                         # (tk, dc)
    kv = jnp.dot(ctx_t.astype(cd), wkv_ref[...],
                 preferred_element_type=jnp.float32)              # (tk, 2*inner)
    kv_b = kv.astype(cd)                                          # single cast
    k_b = kv_b[:, :inner]
    v_b = kv_b[:, inner:]

    bias = bias_ref[0, 0]                                         # (1, tk) f32

    # ---- online softmax per head (static unroll, heads is small) -------------
    for h in range(heads):
        sl = slice(h * dim_head, (h + 1) * dim_head)
        q_h = q_sc[:, sl]                                         # (n, d) bf16
        k_h = k_b[:, sl]                                          # (tk, d) bf16
        v_h = v_b[:, sl]                                          # (tk, d) bf16

        # contraction over last axis of both operands -> no transpose of k
        s = lax.dot_general(q_h, k_h,
                            dimension_numbers=(((1,), (1,)), ((), ())),
                            preferred_element_type=jnp.float32)   # (n, tk)
        s = s + bias                                              # key/pad mask

        m_prev = m_sc[h]                                          # (n, 1)
        m_new = jnp.maximum(m_prev, jnp.max(s, axis=-1, keepdims=True))
        alpha = jnp.exp(m_prev - m_new)
        p = jnp.exp(s - m_new)                                    # (n, tk) f32
        l_sc[h] = alpha * l_sc[h] + jnp.sum(p, axis=-1, keepdims=True)
        acc_sc[h] = alpha * acc_sc[h] + jnp.dot(
            p.astype(cd), v_h, preferred_element_type=jnp.float32)
        m_sc[h] = m_new

    # ---- last KV tile: normalize, merge heads, output projection -------------
    @pl.when(kv_step == n_kv - 1)
    def _finalize():
        for h in range(heads):
            sl = slice(h * dim_head, (h + 1) * dim_head)
            inv_l = pl.reciprocal(l_sc[h], approx=True)           # EUP slot
            o_sc[:, sl] = acc_sc[h] * inv_l                       # lane-offset store
        y = jnp.dot(o_sc[...].astype(cd), wo_ref[...],
                    preferred_element_type=jnp.float32) + bo_ref[...]
        o_ref[0] = y.astype(o_ref.dtype)


# ----------------------------- wrapper ----------------------------------------
def attention_forward(params, x, context=None, mask=None, *,
                      heads, dim_head, kv_tile=256):
    """Pallas implementation of Attention.forward (dropout = identity)."""
    if context is None:                      # self-attention path
        context = x
    b, n, dq = x.shape
    m, dc = context.shape[1], context.shape[2]
    inner = heads * dim_head
    scale = dim_head ** -0.5

    # key mask -> additive bias row: 0 (keep) / NEG_BIG (drop)
    if mask is None:
        bias = jnp.zeros((b, m), jnp.float32)
    else:
        keep = mask.reshape(b, -1).astype(bool)          # 'b ... -> b (...)'
        bias = jnp.where(keep, 0.0, NEG_BIG).astype(jnp.float32)

    # KV tiling: pad keys to a multiple of the tile; padded keys are masked out.
    tk = max(1, min(kv_tile, m))
    m_pad = ((m + tk - 1) // tk) * tk
    if m_pad != m:
        context = jnp.pad(context, ((0, 0), (0, m_pad - m), (0, 0)))
        bias = jnp.pad(bias, ((0, 0), (0, m_pad - m)), constant_values=NEG_BIG)
    n_kv = m_pad // tk

    # expose the KV-tile axis so BlockSpec trailing dims equal full array dims
    ctx4 = context.reshape(b, n_kv, tk, dc)
    bias4 = bias.reshape(b, n_kv, 1, tk)

    # bf16 weights: halve weight DMA / VMEM footprint (f32 accumulation kept)
    wq = params["wq"].astype(MXU_DTYPE)
    wkv = params["wkv"].astype(MXU_DTYPE)
    wo = params["wo"].astype(MXU_DTYPE)
    bo = params["bo"].reshape(1, dq).astype(jnp.float32)

    kernel = functools.partial(_attention_kernel,
                               heads=heads, dim_head=dim_head, scale=scale)

    return pl.pallas_call(
        kernel,
        out_shape=jax.ShapeDtypeStruct((b, n, dq), x.dtype),
        grid=(b, n_kv),                                  # KV (reduction) axis last
        in_specs=[
            pl.BlockSpec((1, n, dq), lambda i, j: (i, 0, 0)),        # x
            pl.BlockSpec((1, 1, tk, dc), lambda i, j: (i, j, 0, 0)), # ctx tile
            pl.BlockSpec((1, 1, 1, tk), lambda i, j: (i, j, 0, 0)),  # mask bias tile
            pl.BlockSpec((dq, inner), lambda i, j: (0, 0)),          # Wq
            pl.BlockSpec((dc, 2 * inner), lambda i, j: (0, 0)),      # Wkv
            pl.BlockSpec((inner, dq), lambda i, j: (0, 0)),          # Wo
            pl.BlockSpec((1, dq), lambda i, j: (0, 0)),              # bo
        ],
        out_specs=pl.BlockSpec((1, n, dq), lambda i, j: (i, 0, 0)),
        scratch_shapes=[
            pltpu.VMEM((n, inner), MXU_DTYPE),                   # q (scaled, bf16)
            pltpu.VMEM((heads, n, 1), jnp.float32),              # running max
            pltpu.VMEM((heads, n, 1), jnp.float32),              # running sum
            pltpu.VMEM((heads, n, dim_head), jnp.float32),       # running acc
            pltpu.VMEM((n, inner), jnp.float32),                 # merged heads
        ],
        compiler_params=pltpu.CompilerParams(
            dimension_semantics=("parallel", "arbitrary"),       # batch parallel, KV reduction
            vmem_limit_bytes=32 * 1024 * 1024),                  # explicit, v7x-safe
    )(x, ctx4, bias4, wq, wkv, wo, bo)


# ----------------------------- pure-JAX reference ------------------------------
def attention_reference(params, x, context=None, mask=None, *, heads, dim_head):
    if context is None:
        context = x
    b, n, _ = x.shape
    m = context.shape[1]
    inner = heads * dim_head
    scale = dim_head ** -0.5
    q = x @ params["wq"]
    kv = context @ params["wkv"]
    k, v = kv[..., :inner], kv[..., inner:]

    def split(t, L):
        return t.reshape(b, L, heads, dim_head).transpose(0, 2, 1, 3)

    q, k, v = split(q, n), split(k, m), split(v, m)
    sim = jnp.einsum("bhid,bhjd->bhij", q, k) * scale
    if mask is not None:
        maskb = mask.reshape(b, 1, 1, m).astype(bool)
        sim = jnp.where(maskb, sim, -jnp.finfo(sim.dtype).max)
    attn = jax.nn.softmax(sim, axis=-1)
    out = jnp.einsum("bhij,bhjd->bhid", attn, v)
    out = out.transpose(0, 2, 1, 3).reshape(b, n, inner)
    return out @ params["wo"] + params["bo"]


# ----------------------------- main --------------------------------------------
if __name__ == "__main__":
    B, N, M = 2, 16, 24
    QUERY_DIM, CONTEXT_DIM = 32, 64
    HEADS, DIM_HEAD = 4, 16
    INNER = HEADS * DIM_HEAD

    key = jax.random.PRNGKey(0)
    ks = jax.random.split(key, 11)

    def w(k, shape, fan_in):
        return jax.random.normal(k, shape, jnp.float32) * (fan_in ** -0.5)

    # Module instance 1: cross-attention (context_dim=64).
    params_cross = dict(
        wq=w(ks[0], (QUERY_DIM, INNER), QUERY_DIM),
        wkv=w(ks[1], (CONTEXT_DIM, 2 * INNER), CONTEXT_DIM),
        wo=w(ks[2], (INNER, QUERY_DIM), INNER),
        bo=jax.random.normal(ks[3], (QUERY_DIM,), jnp.float32) * 0.1,
    )
    # Module instance 2: self-attention (context_dim defaults to query_dim).
    params_self = dict(
        wq=w(ks[4], (QUERY_DIM, INNER), QUERY_DIM),
        wkv=w(ks[5], (QUERY_DIM, 2 * INNER), QUERY_DIM),
        wo=w(ks[6], (INNER, QUERY_DIM), INNER),
        bo=jax.random.normal(ks[7], (QUERY_DIM,), jnp.float32) * 0.1,
    )

    x = jax.random.normal(ks[8], (B, N, QUERY_DIM), jnp.float32)
    ctx = jax.random.normal(ks[9], (B, M, CONTEXT_DIM), jnp.float32)
    mask = jax.random.bernoulli(ks[10], 0.8, (B, M))

    # kv_tile=8 at these tiny shapes so the multi-tile online-softmax path is
    # exercised (3 KV tiles for cross-attn, 2 for self-attn).
    fwd = jax.jit(functools.partial(attention_forward,
                                    heads=HEADS, dim_head=DIM_HEAD, kv_tile=8))

    y_cross = fwd(params_cross, x, ctx, mask)   # cross-attention with key mask
    y_self = fwd(params_self, x, None, None)    # self-attention (context = x)
    jax.block_until_ready((y_cross, y_self))

    r_cross = attention_reference(params_cross, x, ctx, mask,
                                  heads=HEADS, dim_head=DIM_HEAD)
    r_self = attention_reference(params_self, x, None, None,
                                 heads=HEADS, dim_head=DIM_HEAD)

    assert y_cross.shape == (B, N, QUERY_DIM)
    assert y_self.shape == (B, N, QUERY_DIM)
    # bf16 MXU inputs (f32 accumulation) + EUP approx reciprocal vs f32 reference.
    err_c = float(jnp.max(jnp.abs(y_cross - r_cross)))
    err_s = float(jnp.max(jnp.abs(y_self - r_self)))
    assert err_c < 5e-2, f"cross-attention mismatch: max abs err {err_c}"
    assert err_s < 5e-2, f"self-attention mismatch: max abs err {err_s}"

    # TODO(synk): Dropout on attention weights is identity here (inference).
    print("KERNEL_OK")
</pallas_src>

<mosaic_0001>
module attributes {stable_mosaic.version = 11 : i64} {
  func.func @_attention_kernel(%arg0: i32, %arg1: i32, %arg2: memref<1x16x32xf32, #tpu.memory_space<vmem>>, %arg3: memref<1x1x8x64xf32, #tpu.memory_space<vmem>>, %arg4: memref<1x1x1x8xf32, #tpu.memory_space<vmem>>, %arg5: memref<32x64xbf16, #tpu.memory_space<vmem>>, %arg6: memref<64x128xbf16, #tpu.memory_space<vmem>>, %arg7: memref<64x32xbf16, #tpu.memory_space<vmem>>, %arg8: memref<1x32xf32, #tpu.memory_space<vmem>>, %arg9: memref<1x16x32xf32, #tpu.memory_space<vmem>>, %arg10: memref<16x64xbf16, #tpu.memory_space<vmem>>, %arg11: memref<4x16x1xf32, #tpu.memory_space<vmem>>, %arg12: memref<4x16x1xf32, #tpu.memory_space<vmem>>, %arg13: memref<4x16x16xf32, #tpu.memory_space<vmem>>, %arg14: memref<16x64xf32, #tpu.memory_space<vmem>>) attributes {dimension_semantics = [#tpu.dimension_semantics<parallel>, #tpu.dimension_semantics<arbitrary>], iteration_bounds = array<i64: 2, 3>, scalar_prefetch = 0 : i64, scratch_operands = 5 : i64, tpu.core_type = #tpu.core_type<tc>, window_params = [{transform_indices = @transform_0, window_bounds = array<i64: 1, 16, 32>}, {transform_indices = @transform_1, window_bounds = array<i64: 1, 1, 8, 64>}, {transform_indices = @transform_2, window_bounds = array<i64: 1, 1, 1, 8>}, {pipeline_mode = #tpu.pipeline_mode<synchronous>, transform_indices = @transform_3, window_bounds = array<i64: 32, 64>}, {pipeline_mode = #tpu.pipeline_mode<synchronous>, transform_indices = @transform_4, window_bounds = array<i64: 64, 128>}, {pipeline_mode = #tpu.pipeline_mode<synchronous>, transform_indices = @transform_5, window_bounds = array<i64: 64, 32>}, {pipeline_mode = #tpu.pipeline_mode<synchronous>, transform_indices = @transform_6, window_bounds = array<i64: 1, 32>}, {transform_indices = @transform_7, window_bounds = array<i64: 1, 16, 32>}]} {
    %c0_i32 = arith.constant 0 : i32
    %0 = arith.cmpi eq, %arg1, %c0_i32 : i32
    %1 = arith.extui %0 : i1 to i32
    %c0_i32_0 = arith.constant 0 : i32
    %2 = arith.cmpi ne, %1, %c0_i32_0 : i32
    scf.if %2 {
      %c0_101 = arith.constant 0 : index
      %c0_102 = arith.constant 0 : index
      %c0_103 = arith.constant 0 : index
      %168 = vector.load %arg2[%c0_101, %c0_102, %c0_103] : memref<1x16x32xf32, #tpu.memory_space<vmem>>, vector<1x16x32xf32>
      %169 = vector.shape_cast %168 : vector<1x16x32xf32> to vector<16x32xf32>
      %170 = arith.truncf %169 : vector<16x32xf32> to vector<16x32xbf16>
      %c0_104 = arith.constant 0 : index
      %c0_105 = arith.constant 0 : index
      %171 = vector.load %arg5[%c0_104, %c0_105] : memref<32x64xbf16, #tpu.memory_space<vmem>>, vector<32x64xbf16>
      %cst_106 = arith.constant dense<0.000000e+00> : vector<16x64xf32>
      %172 = tpu.matmul %170, %171, %cst_106 {dimension_numbers = #tpu.dot_dimension_numbers<[1], [0], [0], [1], [0, 0, 1, 1], [], []>} : vector<16x32xbf16>, vector<32x64xbf16>, vector<16x64xf32> -> vector<16x64xf32>
      %cst_107 = arith.constant 2.500000e-01 : f32
      %173 = vector.broadcast %cst_107 : f32 to vector<16x64xf32>
      %174 = arith.mulf %172, %173 : vector<16x64xf32>
      %175 = arith.truncf %174 : vector<16x64xf32> to vector<16x64xbf16>
      %c0_108 = arith.constant 0 : index
      %c0_109 = arith.constant 0 : index
      %176 = vector.load %arg10[%c0_108, %c0_109] : memref<16x64xbf16, #tpu.memory_space<vmem>>, vector<16x64xbf16>
      tpu.vector_store %arg10[%c0_108, %c0_109], %175 {strides = array<i32>} : memref<16x64xbf16, #tpu.memory_space<vmem>>, vector<16x64xbf16>,
      %cst_110 = arith.constant 0xFF800000 : f32
      %177 = vector.broadcast %cst_110 : f32 to vector<4x16x1xf32>
      %c0_111 = arith.constant 0 : index
      %c0_112 = arith.constant 0 : index
      %c0_113 = arith.constant 0 : index
      %178 = vector.load %arg11[%c0_111, %c0_112, %c0_113] : memref<4x16x1xf32, #tpu.memory_space<vmem>>, vector<4x16x1xf32>
      tpu.vector_store %arg11[%c0_111, %c0_112, %c0_113], %177 {strides = array<i32>} : memref<4x16x1xf32, #tpu.memory_space<vmem>>, vector<4x16x1xf32>,
      %cst_114 = arith.constant 0.000000e+00 : f32
      %179 = vector.broadcast %cst_114 : f32 to vector<4x16x1xf32>
      %c0_115 = arith.constant 0 : index
      %c0_116 = arith.constant 0 : index
      %c0_117 = arith.constant 0 : index
      %180 = vector.load %arg12[%c0_115, %c0_116, %c0_117] : memref<4x16x1xf32, #tpu.memory_space<vmem>>, vector<4x16x1xf32>
      tpu.vector_store %arg12[%c0_115, %c0_116, %c0_117], %179 {strides = array<i32>} : memref<4x16x1xf32, #tpu.memory_space<vmem>>, vector<4x16x1xf32>,
      %cst_118 = arith.constant 0.000000e+00 : f32
      %181 = vector.broadcast %cst_118 : f32 to vector<4x16x16xf32>
      %c0_119 = arith.constant 0 : index
      %c0_120 = arith.constant 0 : index
      %c0_121 = arith.constant 0 : index
      %182 = vector.load %arg13[%c0_119, %c0_120, %c0_121] : memref<4x16x16xf32, #tpu.memory_space<vmem>>, vector<4x16x16xf32>
      tpu.vector_store %arg13[%c0_119, %c0_120, %c0_121], %181 {strides = array<i32>} : memref<4x16x16xf32, #tpu.memory_space<vmem>>, vector<4x16x16xf32>,
    } else {
    }
    %c0 = arith.constant 0 : index
    %c0_1 = arith.constant 0 : index
    %c0_2 = arith.constant 0 : index
    %c0_3 = arith.constant 0 : index
    %3 = vector.load %arg3[%c0, %c0_1, %c0_2, %c0_3] : memref<1x1x8x64xf32, #tpu.memory_space<vmem>>, vector<1x1x8x64xf32>
    %4 = vector.shape_cast %3 : vector<1x1x8x64xf32> to vector<8x64xf32>
    %5 = arith.truncf %4 : vector<8x64xf32> to vector<8x64xbf16>
    %c0_4 = arith.constant 0 : index
    %c0_5 = arith.constant 0 : index
    %6 = vector.load %arg6[%c0_4, %c0_5] : memref<64x128xbf16, #tpu.memory_space<vmem>>, vector<64x128xbf16>
    %cst = arith.constant dense<0.000000e+00> : vector<8x128xf32>
    %7 = tpu.matmul %5, %6, %cst {dimension_numbers = #tpu.dot_dimension_numbers<[1], [0], [0], [1], [0, 0, 1, 1], [], []>} : vector<8x64xbf16>, vector<64x128xbf16>, vector<8x128xf32> -> vector<8x128xf32>
    %8 = arith.truncf %7 : vector<8x128xf32> to vector<8x128xbf16>
    %9 = vector.extract_strided_slice %8 {offsets = [0, 0], sizes = [8, 64], strides = [1, 1]} : vector<8x128xbf16> to vector<8x64xbf16>
    %10 = vector.extract_strided_slice %8 {offsets = [0, 64], sizes = [8, 64], strides = [1, 1]} : vector<8x128xbf16> to vector<8x64xbf16>
    %c0_6 = arith.constant 0 : index
    %c0_7 = arith.constant 0 : index
    %c0_8 = arith.constant 0 : index
    %c0_9 = arith.constant 0 : index
    %11 = vector.load %arg4[%c0_6, %c0_7, %c0_8, %c0_9] : memref<1x1x1x8xf32, #tpu.memory_space<vmem>>, vector<1x1x1x8xf32>
    %12 = vector.shape_cast %11 : vector<1x1x1x8xf32> to vector<1x8xf32>
    %c0_10 = arith.constant 0 : index
    %c0_11 = arith.constant 0 : index
    %13 = vector.load %arg10[%c0_10, %c0_11] : memref<16x64xbf16, #tpu.memory_space<vmem>>, vector<16x16xbf16>
    %14 = vector.extract_strided_slice %9 {offsets = [0, 0], sizes = [8, 16], strides = [1, 1]} : vector<8x64xbf16> to vector<8x16xbf16>
    %15 = vector.extract_strided_slice %10 {offsets = [0, 0], sizes = [8, 16], strides = [1, 1]} : vector<8x64xbf16> to vector<8x16xbf16>
    %cst_12 = arith.constant dense<0.000000e+00> : vector<16x8xf32>
    %16 = tpu.matmul %13, %14, %cst_12 {dimension_numbers = #tpu.dot_dimension_numbers<[1], [1], [0], [0], [0, 0, 1, 0], [], []>} : vector<16x16xbf16>, vector<8x16xbf16>, vector<16x8xf32> -> vector<16x8xf32>
    %17 = vector.broadcast %12 : vector<1x8xf32> to vector<16x8xf32>
    %18 = arith.addf %16, %17 : vector<16x8xf32>
    %c0_13 = arith.constant 0 : index
    %c0_14 = arith.constant 0 : index
    %c0_15 = arith.constant 0 : index
    %19 = vector.load %arg11[%c0_13, %c0_14, %c0_15] : memref<4x16x1xf32, #tpu.memory_space<vmem>>, vector<1x16x1xf32>
    %20 = vector.shape_cast %19 : vector<1x16x1xf32> to vector<16x1xf32>
    %cst_16 = arith.constant dense<0xFF800000> : vector<16xf32>
    %21 = vector.multi_reduction <maximumf>, %18, %cst_16 [1] : vector<16x8xf32> to vector<16xf32>
    %22 = vector.shape_cast %21 : vector<16xf32> to vector<16x1xf32>
    %23 = arith.maximumf %20, %22 : vector<16x1xf32>
    %24 = arith.subf %20, %23 : vector<16x1xf32>
    %25 = math.exp %24 : vector<16x1xf32>
    %26 = vector.broadcast %23 : vector<16x1xf32> to vector<16x8xf32>
    %27 = arith.subf %18, %26 : vector<16x8xf32>
    %28 = math.exp %27 : vector<16x8xf32>
    %c0_17 = arith.constant 0 : index
    %c0_18 = arith.constant 0 : index
    %c0_19 = arith.constant 0 : index
    %29 = vector.load %arg12[%c0_17, %c0_18, %c0_19] : memref<4x16x1xf32, #tpu.memory_space<vmem>>, vector<1x16x1xf32>
    %30 = vector.shape_cast %29 : vector<1x16x1xf32> to vector<16x1xf32>
    %31 = arith.mulf %25, %30 : vector<16x1xf32>
    %cst_20 = arith.constant dense<0.000000e+00> : vector<16xf32>
    %32 = vector.multi_reduction <add>, %28, %cst_20 [1] : vector<16x8xf32> to vector<16xf32>
    %33 = vector.shape_cast %32 : vector<16xf32> to vector<16x1xf32>
    %34 = arith.addf %31, %33 : vector<16x1xf32>
    %c0_21 = arith.constant 0 : index
    %c0_22 = arith.constant 0 : index
    %c0_23 = arith.constant 0 : index
    %35 = vector.load %arg12[%c0_21, %c0_22, %c0_23] : memref<4x16x1xf32, #tpu.memory_space<vmem>>, vector<1x16x1xf32>
    %36 = vector.shape_cast %35 : vector<1x16x1xf32> to vector<16x1xf32>
    %37 = vector.shape_cast %34 : vector<16x1xf32> to vector<1x16x1xf32>
    tpu.vector_store %arg12[%c0_21, %c0_22, %c0_23], %37 {strides = array<i32>} : memref<4x16x1xf32, #tpu.memory_space<vmem>>, vector<1x16x1xf32>,
    %c0_24 = arith.constant 0 : index
    %c0_25 = arith.constant 0 : index
    %c0_26 = arith.constant 0 : index
    %38 = vector.load %arg13[%c0_24, %c0_25, %c0_26] : memref<4x16x16xf32, #tpu.memory_space<vmem>>, vector<1x16x16xf32>
    %39 = vector.shape_cast %38 : vector<1x16x16xf32> to vector<16x16xf32>
    %40 = vector.broadcast %25 : vector<16x1xf32> to vector<16x16xf32>
    %41 = arith.mulf %40, %39 : vector<16x16xf32>
    %42 = arith.truncf %28 : vector<16x8xf32> to vector<16x8xbf16>
    %cst_27 = arith.constant dense<0.000000e+00> : vector<16x16xf32>
    %43 = tpu.matmul %42, %15, %cst_27 {dimension_numbers = #tpu.dot_dimension_numbers<[1], [0], [0], [1], [0, 0, 1, 1], [], []>} : vector<16x8xbf16>, vector<8x16xbf16>, vector<16x16xf32> -> vector<16x16xf32>
    %44 = arith.addf %41, %43 : vector<16x16xf32>
    %c0_28 = arith.constant 0 : index
    %c0_29 = arith.constant 0 : index
    %c0_30 = arith.constant 0 : index
    %45 = vector.load %arg13[%c0_28, %c0_29, %c0_30] : memref<4x16x16xf32, #tpu.memory_space<vmem>>, vector<1x16x16xf32>
    %46 = vector.shape_cast %45 : vector<1x16x16xf32> to vector<16x16xf32>
    %47 = vector.shape_cast %44 : vector<16x16xf32> to vector<1x16x16xf32>
    tpu.vector_store %arg13[%c0_28, %c0_29, %c0_30], %47 {strides = array<i32>} : memref<4x16x16xf32, #tpu.memory_space<vmem>>, vector<1x16x16xf32>,
    %c0_31 = arith.constant 0 : index
    %c0_32 = arith.constant 0 : index
    %c0_33 = arith.constant 0 : index
    %48 = vector.load %arg11[%c0_31, %c0_32, %c0_33] : memref<4x16x1xf32, #tpu.memory_space<vmem>>, vector<1x16x1xf32>
    %49 = vector.shape_cast %48 : vector<1x16x1xf32> to vector<16x1xf32>
    %50 = vector.shape_cast %23 : vector<16x1xf32> to vector<1x16x1xf32>
    tpu.vector_store %arg11[%c0_31, %c0_32, %c0_33], %50 {strides = array<i32>} : memref<4x16x1xf32, #tpu.memory_space<vmem>>, vector<1x16x1xf32>,
    %c0_34 = arith.constant 0 : index
    %c16 = arith.constant 16 : index
    %51 = vector.load %arg10[%c0_34, %c16] : memref<16x64xbf16, #tpu.memory_space<vmem>>, vector<16x16xbf16>
    %52 = vector.extract_strided_slice %9 {offsets = [0, 16], sizes = [8, 16], strides = [1, 1]} : vector<8x64xbf16> to vector<8x16xbf16>
    %53 = vector.extract_strided_slice %10 {offsets = [0, 16], sizes = [8, 16], strides = [1, 1]} : vector<8x64xbf16> to vector<8x16xbf16>
    %cst_35 = arith.constant dense<0.000000e+00> : vector<16x8xf32>
    %54 = tpu.matmul %51, %52, %cst_35 {dimension_numbers = #tpu.dot_dimension_numbers<[1], [1], [0], [0], [0, 0, 1, 0], [], []>} : vector<16x16xbf16>, vector<8x16xbf16>, vector<16x8xf32> -> vector<16x8xf32>
    %55 = vector.broadcast %12 : vector<1x8xf32> to vector<16x8xf32>
    %56 = arith.addf %54, %55 : vector<16x8xf32>
    %c1 = arith.constant 1 : index
    %c0_36 = arith.constant 0 : index
    %c0_37 = arith.constant 0 : index
    %57 = vector.load %arg11[%c1, %c0_36, %c0_37] : memref<4x16x1xf32, #tpu.memory_space<vmem>>, vector<1x16x1xf32>
    %58 = vector.shape_cast %57 : vector<1x16x1xf32> to vector<16x1xf32>
    %cst_38 = arith.constant dense<0xFF800000> : vector<16xf32>
    %59 = vector.multi_reduction <maximumf>, %56, %cst_38 [1] : vector<16x8xf32> to vector<16xf32>
    %60 = vector.shape_cast %59 : vector<16xf32> to vector<16x1xf32>
    %61 = arith.maximumf %58, %60 : vector<16x1xf32>
    %62 = arith.subf %58, %61 : vector<16x1xf32>
    %63 = math.exp %62 : vector<16x1xf32>
    %64 = vector.broadcast %61 : vector<16x1xf32> to vector<16x8xf32>
    %65 = arith.subf %56, %64 : vector<16x8xf32>
    %66 = math.exp %65 : vector<16x8xf32>
    %c1_39 = arith.constant 1 : index
    %c0_40 = arith.constant 0 : index
    %c0_41 = arith.constant 0 : index
    %67 = vector.load %arg12[%c1_39, %c0_40, %c0_41] : memref<4x16x1xf32, #tpu.memory_space<vmem>>, vector<1x16x1xf32>
    %68 = vector.shape_cast %67 : vector<1x16x1xf32> to vector<16x1xf32>
    %69 = arith.mulf %63, %68 : vector<16x1xf32>
    %cst_42 = arith.constant dense<0.000000e+00> : vector<16xf32>
    %70 = vector.multi_reduction <add>, %66, %cst_42 [1] : vector<16x8xf32> to vector<16xf32>
    %71 = vector.shape_cast %70 : vector<16xf32> to vector<16x1xf32>
    %72 = arith.addf %69, %71 : vector<16x1xf32>
    %c1_43 = arith.constant 1 : index
    %c0_44 = arith.constant 0 : index
    %c0_45 = arith.constant 0 : index
    %73 = vector.load %arg12[%c1_43, %c0_44, %c0_45] : memref<4x16x1xf32, #tpu.memory_space<vmem>>, vector<1x16x1xf32>
    %74 = vector.shape_cast %73 : vector<1x16x1xf32> to vector<16x1xf32>
    %75 = vector.shape_cast %72 : vector<16x1xf32> to vector<1x16x1xf32>
    tpu.vector_store %arg12[%c1_43, %c0_44, %c0_45], %75 {strides = array<i32>} : memref<4x16x1xf32, #tpu.memory_space<vmem>>, vector<1x16x1xf32>,
    %c1_46 = arith.constant 1 : index
    %c0_47 = arith.constant 0 : index
    %c0_48 = arith.constant 0 : index
    %76 = vector.load %arg13[%c1_46, %c0_47, %c0_48] : memref<4x16x16xf32, #tpu.memory_space<vmem>>, vector<1x16x16xf32>
    %77 = vector.shape_cast %76 : vector<1x16x16xf32> to vector<16x16xf32>
    %78 = vector.broadcast %63 : vector<16x1xf32> to vector<16x16xf32>
    %79 = arith.mulf %78, %77 : vector<16x16xf32>
    %80 = arith.truncf %66 : vector<16x8xf32> to vector<16x8xbf16>
    %cst_49 = arith.constant dense<0.000000e+00> : vector<16x16xf32>
    %81 = tpu.matmul %80, %53, %cst_49 {dimension_numbers = #tpu.dot_dimension_numbers<[1], [0], [0], [1], [0, 0, 1, 1], [], []>} : vector<16x8xbf16>, vector<8x16xbf16>, vector<16x16xf32> -> vector<16x16xf32>
    %82 = arith.addf %79, %81 : vector<16x16xf32>
    %c1_50 = arith.constant 1 : index
    %c0_51 = arith.constant 0 : index
    %c0_52 = arith.constant 0 : index
    %83 = vector.load %arg13[%c1_50, %c0_51, %c0_52] : memref<4x16x16xf32, #tpu.memory_space<vmem>>, vector<1x16x16xf32>
    %84 = vector.shape_cast %83 : vector<1x16x16xf32> to vector<16x16xf32>
    %85 = vector.shape_cast %82 : vector<16x16xf32> to vector<1x16x16xf32>
    tpu.vector_store %arg13[%c1_50, %c0_51, %c0_52], %85 {strides = array<i32>} : memref<4x16x16xf32, #tpu.memory_space<vmem>>, vector<1x16x16xf32>,
    %c1_53 = arith.constant 1 : index
    %c0_54 = arith.constant 0 : index
    %c0_55 = arith.constant 0 : index
    %86 = vector.load %arg11[%c1_53, %c0_54, %c0_55] : memref<4x16x1xf32, #tpu.memory_space<vmem>>, vector<1x16x1xf32>
    %87 = vector.shape_cast %86 : vector<1x16x1xf32> to vector<16x1xf32>
    %88 = vector.shape_cast %61 : vector<16x1xf32> to vector<1x16x1xf32>
    tpu.vector_store %arg11[%c1_53, %c0_54, %c0_55], %88 {strides = array<i32>} : memref<4x16x1xf32, #tpu.memory_space<vmem>>, vector<1x16x1xf32>,
    %c0_56 = arith.constant 0 : index
    %c32 = arith.constant 32 : index
    %89 = vector.load %arg10[%c0_56, %c32] : memref<16x64xbf16, #tpu.memory_space<vmem>>, vector<16x16xbf16>
    %90 = vector.extract_strided_slice %9 {offsets = [0, 32], sizes = [8, 16], strides = [1, 1]} : vector<8x64xbf16> to vector<8x16xbf16>
    %91 = vector.extract_strided_slice %10 {offsets = [0, 32], sizes = [8, 16], strides = [1, 1]} : vector<8x64xbf16> to vector<8x16xbf16>
    %cst_57 = arith.constant dense<0.000000e+00> : vector<16x8xf32>
    %92 = tpu.matmul %89, %90, %cst_57 {dimension_numbers = #tpu.dot_dimension_numbers<[1], [1], [0], [0], [0, 0, 1, 0], [], []>} : vector<16x16xbf16>, vector<8x16xbf16>, vector<16x8xf32> -> vector<16x8xf32>
    %93 = vector.broadcast %12 : vector<1x8xf32> to vector<16x8xf32>
    %94 = arith.addf %92, %93 : vector<16x8xf32>
    %c2 = arith.constant 2 : index
    %c0_58 = arith.constant 0 : index
    %c0_59 = arith.constant 0 : index
    %95 = vector.load %arg11[%c2, %c0_58, %c0_59] : memref<4x16x1xf32, #tpu.memory_space<vmem>>, vector<1x16x1xf32>
    %96 = vector.shape_cast %95 : vector<1x16x1xf32> to vector<16x1xf32>
    %cst_60 = arith.constant dense<0xFF800000> : vector<16xf32>
    %97 = vector.multi_reduction <maximumf>, %94, %cst_60 [1] : vector<16x8xf32> to vector<16xf32>
    %98 = vector.shape_cast %97 : vector<16xf32> to vector<16x1xf32>
    %99 = arith.maximumf %96, %98 : vector<16x1xf32>
    %100 = arith.subf %96, %99 : vector<16x1xf32>
    %101 = math.exp %100 : vector<16x1xf32>
    %102 = vector.broadcast %99 : vector<16x1xf32> to vector<16x8xf32>
    %103 = arith.subf %94, %102 : vector<16x8xf32>
    %104 = math.exp %103 : vector<16x8xf32>
    %c2_61 = arith.constant 2 : index
    %c0_62 = arith.constant 0 : index
    %c0_63 = arith.constant 0 : index
    %105 = vector.load %arg12[%c2_61, %c0_62, %c0_63] : memref<4x16x1xf32, #tpu.memory_space<vmem>>, vector<1x16x1xf32>
    %106 = vector.shape_cast %105 : vector<1x16x1xf32> to vector<16x1xf32>
    %107 = arith.mulf %101, %106 : vector<16x1xf32>
    %cst_64 = arith.constant dense<0.000000e+00> : vector<16xf32>
    %108 = vector.multi_reduction <add>, %104, %cst_64 [1] : vector<16x8xf32> to vector<16xf32>
    %109 = vector.shape_cast %108 : vector<16xf32> to vector<16x1xf32>
    %110 = arith.addf %107, %109 : vector<16x1xf32>
    %c2_65 = arith.constant 2 : index
    %c0_66 = arith.constant 0 : index
    %c0_67 = arith.constant 0 : index
    %111 = vector.load %arg12[%c2_65, %c0_66, %c0_67] : memref<4x16x1xf32, #tpu.memory_space<vmem>>, vector<1x16x1xf32>
    %112 = vector.shape_cast %111 : vector<1x16x1xf32> to vector<16x1xf32>
    %113 = vector.shape_cast %110 : vector<16x1xf32> to vector<1x16x1xf32>
    tpu.vector_store %arg12[%c2_65, %c0_66, %c0_67], %113 {strides = array<i32>} : memref<4x16x1xf32, #tpu.memory_space<vmem>>, vector<1x16x1xf32>,
    %c2_68 = arith.constant 2 : index
    %c0_69 = arith.constant 0 : index
    %c0_70 = arith.constant 0 : index
    %114 = vector.load %arg13[%c2_68, %c0_69, %c0_70] : memref<4x16x16xf32, #tpu.memory_space<vmem>>, vector<1x16x16xf32>
    %115 = vector.shape_cast %114 : vector<1x16x16xf32> to vector<16x16xf32>
    %116 = vector.broadcast %101 : vector<16x1xf32> to vector<16x16xf32>
    %117 = arith.mulf %116, %115 : vector<16x16xf32>
    %118 = arith.truncf %104 : vector<16x8xf32> to vector<16x8xbf16>
    %cst_71 = arith.constant dense<0.000000e+00> : vector<16x16xf32>
    %119 = tpu.matmul %118, %91, %cst_71 {dimension_numbers = #tpu.dot_dimension_numbers<[1], [0], [0], [1], [0, 0, 1, 1], [], []>} : vector<16x8xbf16>, vector<8x16xbf16>, vector<16x16xf32> -> vector<16x16xf32>
    %120 = arith.addf %117, %119 : vector<16x16xf32>
    %c2_72 = arith.constant 2 : index
    %c0_73 = arith.constant 0 : index
    %c0_74 = arith.constant 0 : index
    %121 = vector.load %arg13[%c2_72, %c0_73, %c0_74] : memref<4x16x16xf32, #tpu.memory_space<vmem>>, vector<1x16x16xf32>
    %122 = vector.shape_cast %121 : vector<1x16x16xf32> to vector<16x16xf32>
    %123 = vector.shape_cast %120 : vector<16x16xf32> to vector<1x16x16xf32>
    tpu.vector_store %arg13[%c2_72, %c0_73, %c0_74], %123 {strides = array<i32>} : memref<4x16x16xf32, #tpu.memory_space<vmem>>, vector<1x16x16xf32>,
    %c2_75 = arith.constant 2 : index
    %c0_76 = arith.constant 0 : index
    %c0_77 = arith.constant 0 : index
    %124 = vector.load %arg11[%c2_75, %c0_76, %c0_77] : memref<4x16x1xf32, #tpu.memory_space<vmem>>, vector<1x16x1xf32>
    %125 = vector.shape_cast %124 : vector<1x16x1xf32> to vector<16x1xf32>
    %126 = vector.shape_cast %99 : vector<16x1xf32> to vector<1x16x1xf32>
    tpu.vector_store %arg11[%c2_75, %c0_76, %c0_77], %126 {strides = array<i32>} : memref<4x16x1xf32, #tpu.memory_space<vmem>>, vector<1x16x1xf32>,
    %c0_78 = arith.constant 0 : index
    %c48 = arith.constant 48 : index
    %127 = vector.load %arg10[%c0_78, %c48] : memref<16x64xbf16, #tpu.memory_space<vmem>>, vector<16x16xbf16>
    %128 = vector.extract_strided_slice %9 {offsets = [0, 48], sizes = [8, 16], strides = [1, 1]} : vector<8x64xbf16> to vector<8x16xbf16>
    %129 = vector.extract_strided_slice %10 {offsets = [0, 48], sizes = [8, 16], strides = [1, 1]} : vector<8x64xbf16> to vector<8x16xbf16>
    %cst_79 = arith.constant dense<0.000000e+00> : vector<16x8xf32>
    %130 = tpu.matmul %127, %128, %cst_79 {dimension_numbers = #tpu.dot_dimension_numbers<[1], [1], [0], [0], [0, 0, 1, 0], [], []>} : vector<16x16xbf16>, vector<8x16xbf16>, vector<16x8xf32> -> vector<16x8xf32>
    %131 = vector.broadcast %12 : vector<1x8xf32> to vector<16x8xf32>
    %132 = arith.addf %130, %131 : vector<16x8xf32>
    %c3 = arith.constant 3 : index
    %c0_80 = arith.constant 0 : index
    %c0_81 = arith.constant 0 : index
    %133 = vector.load %arg11[%c3, %c0_80, %c0_81] : memref<4x16x1xf32, #tpu.memory_space<vmem>>, vector<1x16x1xf32>
    %134 = vector.shape_cast %133 : vector<1x16x1xf32> to vector<16x1xf32>
    %cst_82 = arith.constant dense<0xFF800000> : vector<16xf32>
    %135 = vector.multi_reduction <maximumf>, %132, %cst_82 [1] : vector<16x8xf32> to vector<16xf32>
    %136 = vector.shape_cast %135 : vector<16xf32> to vector<16x1xf32>
    %137 = arith.maximumf %134, %136 : vector<16x1xf32>
    %138 = arith.subf %134, %137 : vector<16x1xf32>
    %139 = math.exp %138 : vector<16x1xf32>
    %140 = vector.broadcast %137 : vector<16x1xf32> to vector<16x8xf32>
    %141 = arith.subf %132, %140 : vector<16x8xf32>
    %142 = math.exp %141 : vector<16x8xf32>
    %c3_83 = arith.constant 3 : index
    %c0_84 = arith.constant 0 : index
    %c0_85 = arith.constant 0 : index
    %143 = vector.load %arg12[%c3_83, %c0_84, %c0_85] : memref<4x16x1xf32, #tpu.memory_space<vmem>>, vector<1x16x1xf32>
    %144 = vector.shape_cast %143 : vector<1x16x1xf32> to vector<16x1xf32>
    %145 = arith.mulf %139, %144 : vector<16x1xf32>
    %cst_86 = arith.constant dense<0.000000e+00> : vector<16xf32>
    %146 = vector.multi_reduction <add>, %142, %cst_86 [1] : vector<16x8xf32> to vector<16xf32>
    %147 = vector.shape_cast %146 : vector<16xf32> to vector<16x1xf32>
    %148 = arith.addf %145, %147 : vector<16x1xf32>
    %c3_87 = arith.constant 3 : index
    %c0_88 = arith.constant 0 : index
    %c0_89 = arith.constant 0 : index
    %149 = vector.load %arg12[%c3_87, %c0_88, %c0_89] : memref<4x16x1xf32, #tpu.memory_space<vmem>>, vector<1x16x1xf32>
    %150 = vector.shape_cast %149 : vector<1x16x1xf32> to vector<16x1xf32>
    %151 = vector.shape_cast %148 : vector<16x1xf32> to vector<1x16x1xf32>
    tpu.vector_store %arg12[%c3_87, %c0_88, %c0_89], %151 {strides = array<i32>} : memref<4x16x1xf32, #tpu.memory_space<vmem>>, vector<1x16x1xf32>,
    %c3_90 = arith.constant 3 : index
    %c0_91 = arith.constant 0 : index
    %c0_92 = arith.constant 0 : index
    %152 = vector.load %arg13[%c3_90, %c0_91, %c0_92] : memref<4x16x16xf32, #tpu.memory_space<vmem>>, vector<1x16x16xf32>
    %153 = vector.shape_cast %152 : vector<1x16x16xf32> to vector<16x16xf32>
    %154 = vector.broadcast %139 : vector<16x1xf32> to vector<16x16xf32>
    %155 = arith.mulf %154, %153 : vector<16x16xf32>
    %156 = arith.truncf %142 : vector<16x8xf32> to vector<16x8xbf16>
    %cst_93 = arith.constant dense<0.000000e+00> : vector<16x16xf32>
    %157 = tpu.matmul %156, %129, %cst_93 {dimension_numbers = #tpu.dot_dimension_numbers<[1], [0], [0], [1], [0, 0, 1, 1], [], []>} : vector<16x8xbf16>, vector<8x16xbf16>, vector<16x16xf32> -> vector<16x16xf32>
    %158 = arith.addf %155, %157 : vector<16x16xf32>
    %c3_94 = arith.constant 3 : index
    %c0_95 = arith.constant 0 : index
    %c0_96 = arith.constant 0 : index
    %159 = vector.load %arg13[%c3_94, %c0_95, %c0_96] : memref<4x16x16xf32, #tpu.memory_space<vmem>>, vector<1x16x16xf32>
    %160 = vector.shape_cast %159 : vector<1x16x16xf32> to vector<16x16xf32>
    %161 = vector.shape_cast %158 : vector<16x16xf32> to vector<1x16x16xf32>
    tpu.vector_store %arg13[%c3_94, %c0_95, %c0_96], %161 {strides = array<i32>} : memref<4x16x16xf32, #tpu.memory_space<vmem>>, vector<1x16x16xf32>,
    %c3_97 = arith.constant 3 : index
    %c0_98 = arith.constant 0 : index
    %c0_99 = arith.constant 0 : index
    %162 = vector.load %arg11[%c3_97, %c0_98, %c0_99] : memref<4x16x1xf32, #tpu.memory_space<vmem>>, vector<1x16x1xf32>
    %163 = vector.shape_cast %162 : vector<1x16x1xf32> to vector<16x1xf32>
    %164 = vector.shape_cast %137 : vector<16x1xf32> to vector<1x16x1xf32>
    tpu.vector_store %arg11[%c3_97, %c0_98, %c0_99], %164 {strides = array<i32>} : memref<4x16x1xf32, #tpu.memory_space<vmem>>, vector<1x16x1xf32>,
    %c2_i32 = arith.constant 2 : i32
    %165 = arith.cmpi eq, %arg1, %c2_i32 : i32
    %166 = arith.extui %165 : i1 to i32
    %c0_i32_100 = arith.constant 0 : i32
    %167 = arith.cmpi ne, %166, %c0_i32_100 : i32
    scf.if %167 {
      %c0_101 = arith.constant 0 : index
      %c0_102 = arith.constant 0 : index
      %c0_103 = arith.constant 0 : index
      %168 = vector.load %arg12[%c0_101, %c0_102, %c0_103] : memref<4x16x1xf32, #tpu.memory_space<vmem>>, vector<1x16x1xf32>
      %169 = vector.shape_cast %168 : vector<1x16x1xf32> to vector<16x1xf32>
      %170 = tpu.reciprocal %169 {approx = true} : vector<16x1xf32> -> vector<16x1xf32>
      %c0_104 = arith.constant 0 : index
      %c0_105 = arith.constant 0 : index
      %c0_106 = arith.constant 0 : index
      %171 = vector.load %arg13[%c0_104, %c0_105, %c0_106] : memref<4x16x16xf32, #tpu.memory_space<vmem>>, vector<1x16x16xf32>
      %172 = vector.shape_cast %171 : vector<1x16x16xf32> to vector<16x16xf32>
      %173 = vector.broadcast %170 : vector<16x1xf32> to vector<16x16xf32>
      %174 = arith.mulf %172, %173 : vector<16x16xf32>
      %c0_107 = arith.constant 0 : index
      %c0_108 = arith.constant 0 : index
      %175 = vector.load %arg14[%c0_107, %c0_108] : memref<16x64xf32, #tpu.memory_space<vmem>>, vector<16x16xf32>
      tpu.vector_store %arg14[%c0_107, %c0_108], %174 {strides = array<i32>} : memref<16x64xf32, #tpu.memory_space<vmem>>, vector<16x16xf32>,
      %c1_109 = arith.constant 1 : index
      %c0_110 = arith.constant 0 : index
      %c0_111 = arith.constant 0 : index
      %176 = vector.load %arg12[%c1_109, %c0_110, %c0_111] : memref<4x16x1xf32, #tpu.memory_space<vmem>>, vector<1x16x1xf32>
      %177 = vector.shape_cast %176 : vector<1x16x1xf32> to vector<16x1xf32>
      %178 = tpu.reciprocal %177 {approx = true} : vector<16x1xf32> -> vector<16x1xf32>
      %c1_112 = arith.constant 1 : index
      %c0_113 = arith.constant 0 : index
      %c0_114 = arith.constant 0 : index
      %179 = vector.load %arg13[%c1_112, %c0_113, %c0_114] : memref<4x16x16xf32, #tpu.memory_space<vmem>>, vector<1x16x16xf32>
      %180 = vector.shape_cast %179 : vector<1x16x16xf32> to vector<16x16xf32>
      %181 = vector.broadcast %178 : vector<16x1xf32> to vector<16x16xf32>
      %182 = arith.mulf %180, %181 : vector<16x16xf32>
      %c0_115 = arith.constant 0 : index
      %c16_116 = arith.constant 16 : index
      %183 = vector.load %arg14[%c0_115, %c16_116] : memref<16x64xf32, #tpu.memory_space<vmem>>, vector<16x16xf32>
      tpu.vector_store %arg14[%c0_115, %c16_116], %182 {strides = array<i32>} : memref<16x64xf32, #tpu.memory_space<vmem>>, vector<16x16xf32>,
      %c2_117 = arith.constant 2 : index
      %c0_118 = arith.constant 0 : index
      %c0_119 = arith.constant 0 : index
      %184 = vector.load %arg12[%c2_117, %c0_118, %c0_119] : memref<4x16x1xf32, #tpu.memory_space<vmem>>, vector<1x16x1xf32>
      %185 = vector.shape_cast %184 : vector<1x16x1xf32> to vector<16x1xf32>
      %186 = tpu.reciprocal %185 {approx = true} : vector<16x1xf32> -> vector<16x1xf32>
      %c2_120 = arith.constant 2 : index
      %c0_121 = arith.constant 0 : index
      %c0_122 = arith.constant 0 : index
      %187 = vector.load %arg13[%c2_120, %c0_121, %c0_122] : memref<4x16x16xf32, #tpu.memory_space<vmem>>, vector<1x16x16xf32>
      %188 = vector.shape_cast %187 : vector<1x16x16xf32> to vector<16x16xf32>
      %189 = vector.broadcast %186 : vector<16x1xf32> to vector<16x16xf32>
      %190 = arith.mulf %188, %189 : vector<16x16xf32>
      %c0_123 = arith.constant 0 : index
      %c32_124 = arith.constant 32 : index
      %191 = vector.load %arg14[%c0_123, %c32_124] : memref<16x64xf32, #tpu.memory_space<vmem>>, vector<16x16xf32>
      tpu.vector_store %arg14[%c0_123, %c32_124], %190 {strides = array<i32>} : memref<16x64xf32, #tpu.memory_space<vmem>>, vector<16x16xf32>,
      %c3_125 = arith.constant 3 : index
      %c0_126 = arith.constant 0 : index
      %c0_127 = arith.constant 0 : index
      %192 = vector.load %arg12[%c3_125, %c0_126, %c0_127] : memref<4x16x1xf32, #tpu.memory_space<vmem>>, vector<1x16x1xf32>
      %193 = vector.shape_cast %192 : vector<1x16x1xf32> to vector<16x1xf32>
      %194 = tpu.reciprocal %193 {approx = true} : vector<16x1xf32> -> vector<16x1xf32>
      %c3_128 = arith.constant 3 : index
      %c0_129 = arith.constant 0 : index
      %c0_130 = arith.constant 0 : index
      %195 = vector.load %arg13[%c3_128, %c0_129, %c0_130] : memref<4x16x16xf32, #tpu.memory_space<vmem>>, vector<1x16x16xf32>
      %196 = vector.shape_cast %195 : vector<1x16x16xf32> to vector<16x16xf32>
      %197 = vector.broadcast %194 : vector<16x1xf32> to vector<16x16xf32>
      %198 = arith.mulf %196, %197 : vector<16x16xf32>
      %c0_131 = arith.constant 0 : index
      %c48_132 = arith.constant 48 : index
      %199 = vector.load %arg14[%c0_131, %c48_132] : memref<16x64xf32, #tpu.memory_space<vmem>>, vector<16x16xf32>
      tpu.vector_store %arg14[%c0_131, %c48_132], %198 {strides = array<i32>} : memref<16x64xf32, #tpu.memory_space<vmem>>, vector<16x16xf32>,
      %c0_133 = arith.constant 0 : index
      %c0_134 = arith.constant 0 : index
      %200 = vector.load %arg14[%c0_133, %c0_134] : memref<16x64xf32, #tpu.memory_space<vmem>>, vector<16x64xf32>
      %201 = arith.truncf %200 : vector<16x64xf32> to vector<16x64xbf16>
      %c0_135 = arith.constant 0 : index
      %c0_136 = arith.constant 0 : index
      %202 = vector.load %arg7[%c0_135, %c0_136] : memref<64x32xbf16, #tpu.memory_space<vmem>>, vector<64x32xbf16>
      %cst_137 = arith.constant dense<0.000000e+00> : vector<16x32xf32>
      %203 = tpu.matmul %201, %202, %cst_137 {dimension_numbers = #tpu.dot_dimension_numbers<[1], [0], [0], [1], [0, 0, 1, 1], [], []>} : vector<16x64xbf16>, vector<64x32xbf16>, vector<16x32xf32> -> vector<16x32xf32>
      %c0_138 = arith.constant 0 : index
      %c0_139 = arith.constant 0 : index
      %204 = vector.load %arg8[%c0_138, %c0_139] : memref<1x32xf32, #tpu.memory_space<vmem>>, vector<1x32xf32>
      %205 = vector.broadcast %204 : vector<1x32xf32> to vector<16x32xf32>
      %206 = arith.addf %203, %205 : vector<16x32xf32>
      %c0_140 = arith.constant 0 : index
      %c0_141 = arith.constant 0 : index
      %c0_142 = arith.constant 0 : index
      %207 = vector.load %arg9[%c0_140, %c0_141, %c0_142] : memref<1x16x32xf32, #tpu.memory_space<vmem>>, vector<1x16x32xf32>
      %208 = vector.shape_cast %207 : vector<1x16x32xf32> to vector<16x32xf32>
      %209 = vector.shape_cast %206 : vector<16x32xf32> to vector<1x16x32xf32>
      tpu.vector_store %arg9[%c0_140, %c0_141, %c0_142], %209 {strides = array<i32>} : memref<1x16x32xf32, #tpu.memory_space<vmem>>, vector<1x16x32xf32>,
    } else {
    }
    return
  }
  func.func @transform_0(%arg0: i32, %arg1: i32) -> (i32, i32, i32) {
    %c0_i32 = arith.constant 0 : i32
    %c0_i32_0 = arith.constant 0 : i32
    %c0_i32_1 = arith.constant 0 : i32
    return %arg0, %c0_i32, %c0_i32_0 : i32, i32, i32
  }
  func.func @transform_1(%arg0: i32, %arg1: i32) -> (i32, i32, i32, i32) {
    %c0_i32 = arith.constant 0 : i32
    %c0_i32_0 = arith.constant 0 : i32
    %c0_i32_1 = arith.constant 0 : i32
    return %arg0, %arg1, %c0_i32, %c0_i32_0 : i32, i32, i32, i32
  }
  func.func @transform_2(%arg0: i32, %arg1: i32) -> (i32, i32, i32, i32) {
    %c0_i32 = arith.constant 0 : i32
    %c0_i32_0 = arith.constant 0 : i32
    %c0_i32_1 = arith.constant 0 : i32
    return %arg0, %arg1, %c0_i32, %c0_i32_0 : i32, i32, i32, i32
  }
  func.func @transform_3(%arg0: i32, %arg1: i32) -> (i32, i32) {
    %c0_i32 = arith.constant 0 : i32
    %c0_i32_0 = arith.constant 0 : i32
    %c0_i32_1 = arith.constant 0 : i32
    return %c0_i32, %c0_i32_0 : i32, i32
  }
  func.func @transform_4(%arg0: i32, %arg1: i32) -> (i32, i32) {
    %c0_i32 = arith.constant 0 : i32
    %c0_i32_0 = arith.constant 0 : i32
    %c0_i32_1 = arith.constant 0 : i32
    return %c0_i32, %c0_i32_0 : i32, i32
  }
  func.func @transform_5(%arg0: i32, %arg1: i32) -> (i32, i32) {
    %c0_i32 = arith.constant 0 : i32
    %c0_i32_0 = arith.constant 0 : i32
    %c0_i32_1 = arith.constant 0 : i32
    return %c0_i32, %c0_i32_0 : i32, i32
  }
  func.func @transform_6(%arg0: i32, %arg1: i32) -> (i32, i32) {
    %c0_i32 = arith.constant 0 : i32
    %c0_i32_0 = arith.constant 0 : i32
    %c0_i32_1 = arith.constant 0 : i32
    return %c0_i32, %c0_i32_0 : i32, i32
  }
  func.func @transform_7(%arg0: i32, %arg1: i32) -> (i32, i32, i32) {
    %c0_i32 = arith.constant 0 : i32
    %c0_i32_0 = arith.constant 0 : i32
    %c0_i32_1 = arith.constant 0 : i32
    return %arg0, %c0_i32, %c0_i32_0 : i32, i32, i32
  }
}

</mosaic_0001>

<llo_original>
// kernel: attention_forward.1
$region0: #{attention_forward.1}
  #allocation0 [shape = 'u32[]', space=smem, size = 0x4, offset = 0x4, fixed_abs, tag = 'smem constant byte address 0x4 - core index']
  #allocation1 [shape = 'u32[144,128]{1,0:T(1,128)}', space=vmem, size = 0x12000, scoped, tag = 'internal scratch']
  #allocation2 [shape = 'bf16[16,64]{1,0:T(16,128)(2,1)}', space=vmem, size = 0x1000, scoped, tag = 'scratch operand']
  #allocation3 [shape = 'f32[4,16,1]{2,1,0:T(8,128)}', space=vmem, size = 0x8000, scoped, tag = 'scratch operand']
  #allocation4 [shape = 'f32[4,16,1]{2,1,0:T(8,128)}', space=vmem, size = 0x8000, scoped, tag = 'scratch operand']
  #allocation5 [shape = 'f32[4,16,16]{2,1,0:T(8,128)}', space=vmem, size = 0x8000, scoped, tag = 'scratch operand']
  #allocation6 [shape = 'f32[16,64]{1,0:T(8,128)}', space=vmem, size = 0x2000, scoped, tag = 'scratch operand']
  %s0 = inlined_call_operand.vmem [shape: f32[2,16,32], index: 0, kind: input, shape index: {}]
  %s1 = inlined_call_operand.vmem [shape: f32[2,3,8,64], index: 1, kind: input, shape index: {}]
  %s2 = inlined_call_operand.vmem [shape: f32[2,3,1,8], index: 2, kind: input, shape index: {}]
  %s3 = inlined_call_operand.vmem [shape: bf16[32,64], index: 3, kind: input, shape index: {}]
  %s4 = inlined_call_operand.vmem [shape: bf16[64,128], index: 4, kind: input, shape index: {}]
  %s5 = inlined_call_operand.vmem [shape: bf16[64,32], index: 5, kind: input, shape index: {}]
  %s6 = inlined_call_operand.vmem [shape: f32[1,32], index: 6, kind: input, shape index: {}]
  %s7 = inlined_call_operand.hbm [shape: f32[2,16,32], index: 7, kind: output, shape index: {}]
  %s8 = sld [smem:[#allocation0]]
  $region69: #{attention_forward.1} parent=0
    _
  %s10 = ssub.s32 1, %s8
  %s11 = scalar_select 0, %s10, %s8
  $region1: #{attention_forward.1} parent=0
    #allocation7 [shape = 'u8[16384]{0}', space=vmem, size = 0x4000, scoped, tag = 'output window, operand 0']
    #allocation8 [shape = 's32[2]{0}', space=sflag, size = 0x8, scoped, tag = 'scoped memory for attention_forward.1']
    %12 = vsyncpa [#allocation8], 0
    %s13 = scalar_lea.sflag [#allocation8], 1
    %14 = vsyncpa %s13, 0
    loop: start=0, step=1, limit=8
    $region2: #{attention_forward.1} parent=1 // loop_pre_header
      _
    $region3: #{attention_forward.1} parent=1 // loop_header
      %s16 = sphi 0, %s20
      %p17 = scmp.ge.s32.totalorder %s16, 8
      %s23 = sphi 0, %s35
      %s24 = sphi 0, %s31
      %s25 = sphi 0, %s23
      %s26 = sphi 0, %s24
      %s27 = sphi 0, %s25
      %s28 = sphi 0, %s26
      %s38 = sphi 0, %s40
      %s41 = sphi 0, %s38
      %s42 = sphi 0, %s41
      %s58 = sphi 0, %s42
      %s66 = sphi 0, %s68
      %s69 = sphi 0, %s66
      %s70 = sphi 0, %s69
      %s86 = sphi 0, %s70
      %s94 = sphi 0, %s96
      %s97 = sphi 0, %s94
      %s98 = sphi 0, %s97
      %s114 = sphi 0, %s98
      %s118 = sphi 0, %s118
      %s120 = sphi 0, %s118
      %s121 = sphi 0, %s120
      %s135 = sphi 0, %s121
      %s139 = sphi 0, %s139
      %s141 = sphi 0, %s139
      %s142 = sphi 0, %s141
      %s156 = sphi 0, %s142
      %s160 = sphi 0, %s160
      %s162 = sphi 0, %s160
      %s163 = sphi 0, %s162
      %s177 = sphi 0, %s163
      %s181 = sphi 0, %s181
      %s183 = sphi 0, %s181
      %s184 = sphi 0, %s183
      %s198 = sphi 0, %s184
      %s204 = sphi 0, %s206
      %s207 = sphi 0, %s204
      %s208 = sphi 0, %s207
      %s224 = sphi 0, %s208
    $region4: #{attention_forward.1} parent=1 // loop_header_branch
      %19 = sbr.rel (%p17) target = $region8
    $region5: #{attention_forward.1} parent=1 // loop_body
      %s21 = ssub.s32 %s16, 1
      %s22 = ssub.s32 %s16, 2
      %s29 = sadd.s32 1, %s24
      %p30 = scmp.ge.s32.totalorder %s29, 3
      %s31 = scalar_select %p30, 0, %s29
      %s32 = sadd.s32 1, %s23
      %s33 = scalar_select %p30, %s32, %s23
      %p34 = scmp.ge.s32.totalorder %s33, 2
      %s35 = scalar_select %p34, 0, %s33
      %s36 = ssub.s32 %s23, %s35
      %p37 = scmp.eq.s32.totalorder %s36, 0
      %s39 = sadd.s32 %s38, 1
      %s40 = scalar_select %p37, %s38, %s39
      %p43 = pneg %p37
      %p44 = scmp.eq.s32.totalorder %s16, 5
      %p45 = por %p43, %p44
      %p46 = scmp.ne.s32.totalorder %s38, %s41
      %p47 = scmp.eq.s32.totalorder %s16, 0
      %p48 = por %p46, %p47
      %p49 = scmp.ne.s32.totalorder %s38, %s41
      %p50 = scmp.eq.s32.totalorder %s21, 5
      %p51 = por %p49, %p50
      %p52 = scmp.ne.s32.totalorder %s41, %s42
      %p53 = scmp.eq.s32.totalorder %s21, 0
      %p54 = por %p52, %p53
      %p55 = scmp.ne.s32.totalorder %s41, %s42
      %p56 = scmp.eq.s32.totalorder %s22, 5
      %p57 = por %p55, %p56
      %p59 = scmp.ne.s32.totalorder %s42, %s58
      %p60 = scmp.eq.s32.totalorder %s22, 0
      %p61 = por %p59, %p60
      %s62 = ssub.s32 %s23, %s35
      %s63 = ssub.s32 %s24, %s31
      %s64 = sor.u32 %s62, %s63
      %p65 = scmp.eq.s32.totalorder %s64, 0
      %s67 = sadd.s32 %s66, 1
      %s68 = scalar_select %p65, %s66, %s67
      %p71 = pneg %p65
      %p72 = scmp.eq.s32.totalorder %s16, 5
      %p73 = por %p71, %p72
      %p74 = scmp.ne.s32.totalorder %s66, %s69
      %p75 = scmp.eq.s32.totalorder %s16, 0
      %p76 = por %p74, %p75
      %p77 = scmp.ne.s32.totalorder %s66, %s69
      %p78 = scmp.eq.s32.totalorder %s21, 5
      %p79 = por %p77, %p78
      %p80 = scmp.ne.s32.totalorder %s69, %s70
      %p81 = scmp.eq.s32.totalorder %s21, 0
      %p82 = por %p80, %p81
      %p83 = scmp.ne.s32.totalorder %s69, %s70
      %p84 = scmp.eq.s32.totalorder %s22, 5
      %p85 = por %p83, %p84
      %p87 = scmp.ne.s32.totalorder %s70, %s86
      %p88 = scmp.eq.s32.totalorder %s22, 0
      %p89 = por %p87, %p88
      %s90 = ssub.s32 %s23, %s35
      %s91 = ssub.s32 %s24, %s31
      %s92 = sor.u32 %s90, %s91
      %p93 = scmp.eq.s32.totalorder %s92, 0
      %s95 = sadd.s32 %s94, 1
      %s96 = scalar_select %p93, %s94, %s95
      %p99 = pneg %p93
      %p100 = scmp.eq.s32.totalorder %s16, 5
      %p101 = por %p99, %p100
      %p102 = scmp.ne.s32.totalorder %s94, %s97
      %p103 = scmp.eq.s32.totalorder %s16, 0
      %p104 = por %p102, %p103
      %p105 = scmp.ne.s32.totalorder %s94, %s97
      %p106 = scmp.eq.s32.totalorder %s21, 5
      %p107 = por %p105, %p106
      %p108 = scmp.ne.s32.totalorder %s97, %s98
      %p109 = scmp.eq.s32.totalorder %s21, 0
      %p110 = por %p108, %p109
      %p111 = scmp.ne.s32.totalorder %s97, %s98
      %p112 = scmp.eq.s32.totalorder %s22, 5
      %p113 = por %p111, %p112
      %p115 = scmp.ne.s32.totalorder %s98, %s114
      %p116 = scmp.eq.s32.totalorder %s22, 0
      %p117 = por %p115, %p116
      %s119 = sadd.s32 %s118, 1
      %p122 = scmp.eq.s32.totalorder %s16, 5
      %p123 = scmp.ne.s32.totalorder %s118, %s120
      %p124 = scmp.eq.s32.totalorder %s16, 0
      %p125 = por %p123, %p124
      %p126 = scmp.ne.s32.totalorder %s118, %s120
      %p127 = scmp.eq.s32.totalorder %s21, 5
      %p128 = por %p126, %p127
      %p129 = scmp.ne.s32.totalorder %s120, %s121
      %p130 = scmp.eq.s32.totalorder %s21, 0
      %p131 = por %p129, %p130
      %p132 = scmp.ne.s32.totalorder %s120, %s121
      %p133 = scmp.eq.s32.totalorder %s22, 5
      %p134 = por %p132, %p133
      %p136 = scmp.ne.s32.totalorder %s121, %s135
      %p137 = scmp.eq.s32.totalorder %s22, 0
      %p138 = por %p136, %p137
      %s140 = sadd.s32 %s139, 1
      %p143 = scmp.eq.s32.totalorder %s16, 5
      %p144 = scmp.ne.s32.totalorder %s139, %s141
      %p145 = scmp.eq.s32.totalorder %s16, 0
      %p146 = por %p144, %p145
      %p147 = scmp.ne.s32.totalorder %s139, %s141
      %p148 = scmp.eq.s32.totalorder %s21, 5
      %p149 = por %p147, %p148
      %p150 = scmp.ne.s32.totalorder %s141, %s142
      %p151 = scmp.eq.s32.totalorder %s21, 0
      %p152 = por %p150, %p151
      %p153 = scmp.ne.s32.totalorder %s141, %s142
      %p154 = scmp.eq.s32.totalorder %s22, 5
      %p155 = por %p153, %p154
      %p157 = scmp.ne.s32.totalorder %s142, %s156
      %p158 = scmp.eq.s32.totalorder %s22, 0
      %p159 = por %p157, %p158
      %s161 = sadd.s32 %s160, 1
      %p164 = scmp.eq.s32.totalorder %s16, 5
      %p165 = scmp.ne.s32.totalorder %s160, %s162
      %p166 = scmp.eq.s32.totalorder %s16, 0
      %p167 = por %p165, %p166
      %p168 = scmp.ne.s32.totalorder %s160, %s162
      %p169 = scmp.eq.s32.totalorder %s21, 5
      %p170 = por %p168, %p169
      %p171 = scmp.ne.s32.totalorder %s162, %s163
      %p172 = scmp.eq.s32.totalorder %s21, 0
      %p173 = por %p171, %p172
      %p174 = scmp.ne.s32.totalorder %s162, %s163
      %p175 = scmp.eq.s32.totalorder %s22, 5
      %p176 = por %p174, %p175
      %p178 = scmp.ne.s32.totalorder %s163, %s177
      %p179 = scmp.eq.s32.totalorder %s22, 0
      %p180 = por %p178, %p179
      %s182 = sadd.s32 %s181, 1
      %p185 = scmp.eq.s32.totalorder %s16, 5
      %p186 = scmp.ne.s32.totalorder %s181, %s183
      %p187 = scmp.eq.s32.totalorder %s16, 0
      %p188 = por %p186, %p187
      %p189 = scmp.ne.s32.totalorder %s181, %s183
      %p190 = scmp.eq.s32.totalorder %s21, 5
      %p191 = por %p189, %p190
      %p192 = scmp.ne.s32.totalorder %s183, %s184
      %p193 = scmp.eq.s32.totalorder %s21, 0
      %p194 = por %p192, %p193
      %p195 = scmp.ne.s32.totalorder %s183, %s184
      %p196 = scmp.eq.s32.totalorder %s22, 5
      %p197 = por %p195, %p196
      %p199 = scmp.ne.s32.totalorder %s184, %s198
      %p200 = scmp.eq.s32.totalorder %s22, 0
      %p201 = por %p199, %p200
      %s202 = ssub.s32 %s23, %s35
      %p203 = scmp.eq.s32.totalorder %s202, 0
      %s205 = sadd.s32 %s204, 1
      %s206 = scalar_select %p203, %s204, %s205
      %p209 = pneg %p203
      %p210 = scmp.eq.s32.totalorder %s16, 5
      %p211 = por %p209, %p210
      %p212 = scmp.ne.s32.totalorder %s204, %s207
      %p213 = scmp.eq.s32.totalorder %s16, 0
      %p214 = por %p212, %p213
      %p215 = scmp.ne.s32.totalorder %s204, %s207
      %p216 = scmp.eq.s32.totalorder %s21, 5
      %p217 = por %p215, %p216
      %p218 = scmp.ne.s32.totalorder %s207, %s208
      %p219 = scmp.eq.s32.totalorder %s21, 0
      %p220 = por %p218, %p219
      %p221 = scmp.ne.s32.totalorder %s207, %s208
      %p222 = scmp.eq.s32.totalorder %s22, 5
      %p223 = por %p221, %p222
      %p225 = scmp.ne.s32.totalorder %s208, %s224
      %p226 = scmp.eq.s32.totalorder %s22, 0
      %p227 = por %p225, %p226
      %p228 = scmp.le.s32.totalorder 1, %s16
      %p229 = scmp.lt.s32.totalorder %s16, 7
      %p230 = pnand %p228, %p229
      %p231 = pneg %p230
      // Predicated region
      $region9: #{attention_forward.1} parent=5 // pred_check
        _
      $region10: #{attention_forward.1} parent=5 // pred_check_branch
        %233 = sbr.rel (%p230) target = $region12
      $region11: #{attention_forward.1} parent=5 // pred_region
        %s234 = ssub.s32 %s16, 1
        // Predicated region
        $region13: #{attention_forward.1} parent=11 // pred_check
          %p235 = pneg %p131
        $region14: #{attention_forward.1} parent=11 // pred_check_branch
          %237 = sbr.rel (%p235) target = $region16
        $region15: #{attention_forward.1} parent=11 // pred_region
          _
        $region16: #{attention_forward.1} parent=11 // pred_fallthru
          _
        // Predicated region
        $region17: #{attention_forward.1} parent=11 // pred_check
          %p238 = pneg %p152
        $region18: #{attention_forward.1} parent=11 // pred_check_branch
          %240 = sbr.rel (%p238) target = $region20
        $region19: #{attention_forward.1} parent=11 // pred_region
          _
        $region20: #{attention_forward.1} parent=11 // pred_fallthru
          _
        // Predicated region
        $region21: #{attention_forward.1} parent=11 // pred_check
          %p241 = pneg %p173
        $region22: #{attention_forward.1} parent=11 // pred_check_branch
          %243 = sbr.rel (%p241) target = $region24
        $region23: #{attention_forward.1} parent=11 // pred_region
          _
        $region24: #{attention_forward.1} parent=11 // pred_fallthru
          _
        // Predicated region
        $region25: #{attention_forward.1} parent=11 // pred_check
          %p244 = pneg %p194
        $region26: #{attention_forward.1} parent=11 // pred_check_branch
          %246 = sbr.rel (%p244) target = $region28
        $region27: #{attention_forward.1} parent=11 // pred_region
          _
        $region28: #{attention_forward.1} parent=11 // pred_fallthru
          _
      $region12: #{attention_forward.1} parent=5 // pred_fallthru
        _
      %p247 = scmp.lt.s32.totalorder %s16, 6
      // Predicated region
      $region29: #{attention_forward.1} parent=5 // pred_check
        %p248 = pneg %p247
      $region30: #{attention_forward.1} parent=5 // pred_check_branch
        %250 = sbr.rel (%p248) target = $region32
      $region31: #{attention_forward.1} parent=5 // pred_region
        // Predicated region
        $region33: #{attention_forward.1} parent=31 // pred_check
          %p251 = pneg %p48
        $region34: #{attention_forward.1} parent=31 // pred_check_branch
          %253 = sbr.rel (%p251) target = $region36
        $region35: #{attention_forward.1} parent=31 // pred_region
          %p254 = scmp.lt.s32.totalorder %s23, 1
          %s255 = scalar_select %p254, %s23, 1
          %s256 = smul.addr %s255, 2
          %s257 = smul.addr %s256, 8
          %s258 = scalar_lea.vmem %s0, %s257
        $region36: #{attention_forward.1} parent=31 // pred_fallthru
          _
        // Predicated region
        $region37: #{attention_forward.1} parent=31 // pred_check
          %p259 = pneg %p76
        $region38: #{attention_forward.1} parent=31 // pred_check_branch
          %261 = sbr.rel (%p259) target = $region40
        $region39: #{attention_forward.1} parent=31 // pred_region
          %p262 = scmp.lt.s32.totalorder %s23, 1
          %s263 = scalar_select %p262, %s23, 1
          %p264 = scmp.lt.s32.totalorder %s24, 2
          %s265 = scalar_select %p264, %s24, 2
          %s266 = smul.addr %s263, 3
          %s267 = sadd.s32 %s265, %s266
          %s268 = smul.addr %s267, 8
          %s269 = scalar_lea.vmem %s1, %s268
        $region40: #{attention_forward.1} parent=31 // pred_fallthru
          _
        // Predicated region
        $region41: #{attention_forward.1} parent=31 // pred_check
          %p270 = pneg %p104
        $region42: #{attention_forward.1} parent=31 // pred_check_branch
          %272 = sbr.rel (%p270) target = $region44
        $region43: #{attention_forward.1} parent=31 // pred_region
          %p273 = scmp.lt.s32.totalorder %s23, 1
          %s274 = scalar_select %p273, %s23, 1
          %p275 = scmp.lt.s32.totalorder %s24, 2
          %s276 = scalar_select %p275, %s24, 2
          %s277 = smul.addr %s274, 3
          %s278 = sadd.s32 %s276, %s277
          %s279 = scalar_lea.vmem %s2, %s278
        $region44: #{attention_forward.1} parent=31 // pred_fallthru
          _
      $region32: #{attention_forward.1} parent=5 // pred_fallthru
        _
      %p280 = scmp.le.s32.totalorder 1, %s16
      %p281 = scmp.lt.s32.totalorder %s16, 7
      %p282 = pnand %p280, %p281
      %p283 = pneg %p282
      // Predicated region
      $region45: #{attention_forward.1} parent=5 // pred_check
        _
      $region46: #{attention_forward.1} parent=5 // pred_check_branch
        %285 = sbr.rel (%p282) target = $region48
      $region47: #{attention_forward.1} parent=5 // pred_region
        %s286 = ssub.s32 %s16, 1
        %p287 = scmp.lt.s32.totalorder %s25, 1
        %s288 = scalar_select %p287, %s25, 1
        %s289 = smul.addr %s288, 2
        %s290 = smul.addr %s289, 8
        %s291 = scalar_lea.vmem %s0, %s290
        %p292 = pneg %p54
        %p293 = pneg %p51
        %p294 = scmp.lt.s32.totalorder %s25, 1
        %s295 = scalar_select %p294, %s25, 1
        %p296 = scmp.lt.s32.totalorder %s26, 2
        %s297 = scalar_select %p296, %s26, 2
        %s298 = smul.addr %s295, 3
        %s299 = sadd.s32 %s297, %s298
        %s300 = smul.addr %s299, 8
        %s301 = scalar_lea.vmem %s1, %s300
        %p302 = pneg %p82
        %p303 = pneg %p79
        %p304 = scmp.lt.s32.totalorder %s25, 1
        %s305 = scalar_select %p304, %s25, 1
        %p306 = scmp.lt.s32.totalorder %s26, 2
        %s307 = scalar_select %p306, %s26, 2
        %s308 = smul.addr %s305, 3
        %s309 = sadd.s32 %s307, %s308
        %s310 = scalar_lea.vmem %s2, %s309
        %p311 = pneg %p110
        %p312 = pneg %p107
        %p313 = pneg %p131
        %p314 = pneg %p128
        %p315 = pneg %p152
        %p316 = pneg %p149
        %p317 = pneg %p173
        %p318 = pneg %p170
        %p319 = pneg %p194
        %p320 = pneg %p191
        %p321 = pneg %p220
        %p322 = pneg %p217
        %s323 = sand.u32 %s207, 1
        %s324 = scalar_lea.sflag [#allocation8], %s323
        %s325 = sand.u32 %s207, 1
        %s326 = smul.addr %s325, 16
        %s327 = scalar_lea.vmem [#allocation7], %s326
        %p328 = scmp.lt.s32.totalorder %s25, 1
        %s329 = scalar_select %p328, %s25, 1
        %s330 = smul.addr %s329, 2
        %s331 = smul.addr %s330, 8
        %s332 = scalar_lea.vmem %s0, %s331
        %p333 = scmp.lt.s32.totalorder %s25, 1
        %s334 = scalar_select %p333, %s25, 1
        %p335 = scmp.lt.s32.totalorder %s26, 2
        %s336 = scalar_select %p335, %s26, 2
        %s337 = smul.addr %s334, 3
        %s338 = sadd.s32 %s336, %s337
        %s339 = smul.addr %s338, 8
        %s340 = scalar_lea.vmem %s1, %s339
        %p341 = scmp.lt.s32.totalorder %s25, 1
        %s342 = scalar_select %p341, %s25, 1
        %p343 = scmp.lt.s32.totalorder %s26, 2
        %s344 = scalar_select %p343, %s26, 2
        %s345 = smul.addr %s342, 3
        %s346 = sadd.s32 %s344, %s345
        %s347 = scalar_lea.vmem %s2, %s346
        %p349 = scmp.eq.s32.totalorder %s26, 0
        // Predicated region
        $region49: #{attention_forward.1} parent=47 // pred_check
          %p350 = pneg %p349
        $region50: #{attention_forward.1} parent=47 // pred_check_branch
          %352 = sbr.rel (%p350) target = $region52
        $region51: #{attention_forward.1} parent=47 // pred_region
          %v353 = vld [vmem:[%s332] sm:$0xff]
          %v354 = vld [vmem:[%s332 + $0x8] sm:$0xff]
          %v355 = vpack.c.bf16 %v354, %v353
          %v356 = vld [vmem:[%s3] sm:$0xf]
          %v357 = vld [vmem:[%s3 + $0x4] sm:$0xf]
          %v358 = vld [vmem:[%s3 + $0x8] sm:$0xf]
          %v359 = vld [vmem:[%s3 + $0xc] sm:$0xf]
          %v364 = vunpack.c.l.b16 %v356
          %v365 = vunpack.c.l.b16 %v357
          %v366 = vunpack.c.l.b16 %v358
          %v367 = vunpack.c.l.b16 %v359
          %v368 = vpack.c.b16 %v365, %v364
          %v369 = vpack.c.b16 %v367, %v366
          %vm372 = vcmask 261120
          %v374 = vsel %vm372, %v355, 0
          %376 = vmatprep.subr.bf16.mxu0 0
          %377 = vmatpush1.bf16.msra.mxu0 %v368
          %378 = vmatprep.subr.bf16.mxu0 0
          %379 = vmatpush1.bf16.msra.mxu0 %v369
          %380 = vmatprep.subr.bf16.mxu0 0
          %381 = vmatpush1.bf16.msra.mxu0 0
          %382 = vmatprep.subr.bf16.mxu0 0
          %383 = vmatpush1.bf16.msra.mxu0 0
          %384 = vmatprep.subr.bf16.mxu0 0
          %385 = vmatpush1.bf16.msra.mxu0 0
          %386 = vmatprep.subr.bf16.mxu0 0
          %387 = vmatpush1.bf16.msra.mxu0 0
          %388 = vmatprep.subr.bf16.mxu0 0
          %389 = vmatpush1.bf16.msra.mxu0 0
          %390 = vmatprep.subr.bf16.mxu0 0
          %391 = vmatpush1.bf16.msra.mxu0 0
          %392 = vmatprep.subr.bf16.mxu0 0
          %393 = vmatpush1.bf16.msra.mxu0 0
          %394 = vmatprep.subr.bf16.mxu0 0
          %395 = vmatpush1.bf16.msra.mxu0 0
          %396 = vmatprep.subr.bf16.mxu0 0
          %397 = vmatpush1.bf16.msra.mxu0 0
          %398 = vmatprep.subr.bf16.mxu0 0
          %399 = vmatpush1.bf16.msra.mxu0 0
          %400 = vmatprep.subr.bf16.mxu0 0
          %401 = vmatpush1.bf16.msra.mxu0 0
          %402 = vmatprep.subr.bf16.mxu0 0
          %403 = vmatpush1.bf16.msra.mxu0 0
          %404 = vmatprep.subr.bf16.mxu0 0
          %405 = vmatpush1.bf16.msra.mxu0 0
          %406 = vmatprep.subr.bf16.mxu0 0
          %407 = vmatpush1.bf16.msra.mxu0 0
          %408 = vmatprep.mubr.bf16.mxu0 0
          %409 = vmatmul.mubr.bf16.gmra.mrb[0].mxu0 %v374
          %v410 = vpop.f32.mrb[0].mxu0
          %v411 = vadd.f32 0.0, %v410
          %v412 = vpop.f32.mrb[0].mxu0
          %v413 = vpop.f32.mrb[0].mxu0
          %v414 = vadd.f32 0.0, %v413
          %v415 = vpop.f32.mrb[0].mxu0
          %416 = vdwg.mxu0
          %v417 = vmul.f32 %v411, 0.25
          %v418 = vmul.f32 %v414, 0.25
          %v419 = vpack.c.bf16 %v418, %v417
          %vm420 = vcmask 523264
          %421 = vst.msk [vmem:[#allocation2] sm:$0xff] %vm420, %v419
          %vm422 = vcmask 7168
          %423 = vst.msk [vmem:[#allocation3] sm:$0xff] %vm422, -inf
          %424 = vst.msk [vmem:[#allocation3 + $0x8] sm:$0xff] %vm422, -inf
          %425 = vst.msk [vmem:[#allocation3 + $0x10] sm:$0xff] %vm422, -inf
          %426 = vst.msk [vmem:[#allocation3 + $0x18] sm:$0xff] %vm422, -inf
          %427 = vst.msk [vmem:[#allocation3 + $0x20] sm:$0xff] %vm422, -inf
          %428 = vst.msk [vmem:[#allocation3 + $0x28] sm:$0xff] %vm422, -inf
          %429 = vst.msk [vmem:[#allocation3 + $0x30] sm:$0xff] %vm422, -inf
          %430 = vst.msk [vmem:[#allocation3 + $0x38] sm:$0xff] %vm422, -inf
          %431 = vst.msk [vmem:[#allocation4] sm:$0xff] %vm422, 0.0
          %432 = vst.msk [vmem:[#allocation4 + $0x8] sm:$0xff] %vm422, 0.0
          %433 = vst.msk [vmem:[#allocation4 + $0x10] sm:$0xff] %vm422, 0.0
          %434 = vst.msk [vmem:[#allocation4 + $0x18] sm:$0xff] %vm422, 0.0
          %435 = vst.msk [vmem:[#allocation4 + $0x20] sm:$0xff] %vm422, 0.0
          %436 = vst.msk [vmem:[#allocation4 + $0x28] sm:$0xff] %vm422, 0.0
          %437 = vst.msk [vmem:[#allocation4 + $0x30] sm:$0xff] %vm422, 0.0
          %438 = vst.msk [vmem:[#allocation4 + $0x38] sm:$0xff] %vm422, 0.0
          %vm439 = vcmask 130048
          %440 = vst.msk [vmem:[#allocation5] sm:$0xff] %vm439, 0.0
          %441 = vst.msk [vmem:[#allocation5 + $0x8] sm:$0xff] %vm439, 0.0
          %442 = vst.msk [vmem:[#allocation5 + $0x10] sm:$0xff] %vm439, 0.0
          %443 = vst.msk [vmem:[#allocation5 + $0x18] sm:$0xff] %vm439, 0.0
          %444 = vst.msk [vmem:[#allocation5 + $0x20] sm:$0xff] %vm439, 0.0
          %445 = vst.msk [vmem:[#allocation5 + $0x28] sm:$0xff] %vm439, 0.0
          %446 = vst.msk [vmem:[#allocation5 + $0x30] sm:$0xff] %vm439, 0.0
          %447 = vst.msk [vmem:[#allocation5 + $0x38] sm:$0xff] %vm439, 0.0
        $region52: #{attention_forward.1} parent=47 // pred_fallthru
          _
        %v448 = vld [vmem:[%s340] sm:$0xff]
        %v449 = vpack.c.bf16 %v448, %v448
        %v450 = vld [vmem:[%s4] sm:$0xf]
        %v451 = vld [vmem:[%s4 + $0x4] sm:$0xf]
        %v452 = vld [vmem:[%s4 + $0x8] sm:$0xf]
        %v453 = vld [vmem:[%s4 + $0xc] sm:$0xf]
        %v454 = vld [vmem:[%s4 + $0x10] sm:$0xf]
        %v455 = vld [vmem:[%s4 + $0x14] sm:$0xf]
        %v456 = vld [vmem:[%s4 + $0x18] sm:$0xf]
        %v457 = vld [vmem:[%s4 + $0x1c] sm:$0xf]
        %v466 = vunpack.c.l.b16 %v450
        %v467 = vunpack.c.l.b16 %v451
        %v468 = vunpack.c.l.b16 %v452
        %v469 = vunpack.c.l.b16 %v453
        %v470 = vunpack.c.l.b16 %v454
        %v471 = vunpack.c.l.b16 %v455
        %v472 = vunpack.c.l.b16 %v456
        %v473 = vunpack.c.l.b16 %v457
        %v474 = vpack.c.b16 %v467, %v466
        %v475 = vpack.c.b16 %v469, %v468
        %v476 = vpack.c.b16 %v471, %v470
        %v477 = vpack.c.b16 %v473, %v472
        %vm482 = vcmask 523264
        %v484 = vsel %vm482, %v449, 0
        %486 = vmatprep.subr.bf16.mxu0 0
        %487 = vmatpush1.bf16.msra.mxu0 %v474
        %488 = vmatprep.subr.bf16.mxu0 0
        %489 = vmatpush1.bf16.msra.mxu0 %v475
        %490 = vmatprep.subr.bf16.mxu0 0
        %491 = vmatpush1.bf16.msra.mxu0 %v476
        %492 = vmatprep.subr.bf16.mxu0 0
        %493 = vmatpush1.bf16.msra.mxu0 %v477
        %494 = vmatprep.subr.bf16.mxu0 0
        %495 = vmatpush1.bf16.msra.mxu0 0
        %496 = vmatprep.subr.bf16.mxu0 0
        %497 = vmatpush1.bf16.msra.mxu0 0
        %498 = vmatprep.subr.bf16.mxu0 0
        %499 = vmatpush1.bf16.msra.mxu0 0
        %500 = vmatprep.subr.bf16.mxu0 0
        %501 = vmatpush1.bf16.msra.mxu0 0
        %502 = vmatprep.subr.bf16.mxu0 0
        %503 = vmatpush1.bf16.msra.mxu0 0
        %504 = vmatprep.subr.bf16.mxu0 0
        %505 = vmatpush1.bf16.msra.mxu0 0
        %506 = vmatprep.subr.bf16.mxu0 0
        %507 = vmatpush1.bf16.msra.mxu0 0
        %508 = vmatprep.subr.bf16.mxu0 0
        %509 = vmatpush1.bf16.msra.mxu0 0
        %510 = vmatprep.subr.bf16.mxu0 0
        %511 = vmatpush1.bf16.msra.mxu0 0
        %512 = vmatprep.subr.bf16.mxu0 0
        %513 = vmatpush1.bf16.msra.mxu0 0
        %514 = vmatprep.subr.bf16.mxu0 0
        %515 = vmatpush1.bf16.msra.mxu0 0
        %516 = vmatprep.subr.bf16.mxu0 0
        %517 = vmatpush1.bf16.msra.mxu0 0
        %518 = vmatprep.mubr.bf16.mxu0 0
        %519 = vmatmul.mubr.bf16.gmra.mrb[0].mxu0 %v484
        %v520 = vpop.f32.mrb[0].mxu0
        %v521 = vadd.f32 0.0, %v520
        %v522 = vpop.f32.mrb[0].mxu0
        %v523 = vpop.f32.mrb[0].mxu0
        %v524 = vpop.f32.mrb[0].mxu0
        %525 = vdwg.mxu0
        %v526 = vpack.c.bf16 %v521, %v521
        %v527 = vld [vmem:[%s347] sm:$0x1]
        %v528 = vld [vmem:[#allocation2] sm:$0xff]
        %v530 = vlaneseq
        %v531 = vshrl.u32 %v530, 7
        %v532 = vsub.s32 0, %v531
        %v533 = vrot.slane %v527, %v532
        %vm535 = vcmask 130048
        %v537 = vsel %vm535, %v528, 0
        %v540 = vsel %vm535, %v526, 0
        %542 = vmatprep.subr.bf16.mxu0 0
        %543 = vmatpush1.bf16.xpose.msra.mxu0 %v540
        %544 = vmatprep.subr.bf16.mxu0 0
        %545 = vmatpush1.bf16.xpose.msra.mxu0 0
        %546 = vmatprep.subr.bf16.mxu0 0
        %547 = vmatpush1.bf16.xpose.msra.mxu0 0
        %548 = vmatprep.subr.bf16.mxu0 0
        %549 = vmatpush1.bf16.xpose.msra.mxu0 0
        %550 = vmatprep.subr.bf16.mxu0 0
        %551 = vmatpush1.bf16.xpose.msra.mxu0 0
        %552 = vmatprep.subr.bf16.mxu0 0
        %553 = vmatpush1.bf16.xpose.msra.mxu0 0
        %554 = vmatprep.subr.bf16.mxu0 0
        %555 = vmatpush1.bf16.xpose.msra.mxu0 0
        %556 = vmatprep.subr.bf16.mxu0 0
        %557 = vmatpush1.bf16.xpose.msra.mxu0 0
        %558 = vmatprep.subr.bf16.mxu0 0
        %559 = vmatpush1.bf16.xpose.msra.mxu0 0
        %560 = vmatprep.subr.bf16.mxu0 0
        %561 = vmatpush1.bf16.xpose.msra.mxu0 0
        %562 = vmatprep.subr.bf16.mxu0 0
        %563 = vmatpush1.bf16.xpose.msra.mxu0 0
        %564 = vmatprep.subr.bf16.mxu0 0
        %565 = vmatpush1.bf16.xpose.msra.mxu0 0
        %566 = vmatprep.subr.bf16.mxu0 0
        %567 = vmatpush1.bf16.xpose.msra.mxu0 0
        %568 = vmatprep.subr.bf16.mxu0 0
        %569 = vmatpush1.bf16.xpose.msra.mxu0 0
        %570 = vmatprep.subr.bf16.mxu0 0
        %571 = vmatpush1.bf16.xpose.msra.mxu0 0
        %572 = vmatprep.subr.bf16.mxu0 0
        %573 = vmatpush1.bf16.xpose.msra.mxu0 0
        %574 = vmatprep.mubr.bf16.mxu0 0
        %575 = vmatmul.mubr.bf16.gmra.mrb[0].mxu0 %v537
        %v576 = vpop.f32.mrb[0].mxu0
        %v577 = vadd.f32 %v533, %v576
        %v578 = vpop.f32.mrb[0].mxu0
        %v579 = vpop.f32.mrb[0].mxu0
        %v580 = vadd.f32 %v533, %v579
        %v581 = vpop.f32.mrb[0].mxu0
        %582 = vdwg.mxu0
        %v583 = vld [vmem:[#allocation3] sm:$0xff]
        %v584 = vld [vmem:[#allocation3 + $0x8] sm:$0xff]
        %vm585 = vcmask 64512
        %v586 = vsel %vm585, %v577, -inf
        %587 = vmax.xlane.f32.xlu0 %v586
        %v588 = vpop.xlane.xlu0 %587
        %v589 = vsel %vm585, %v580, -inf
        %590 = vmax.xlane.f32.xlu0 %v589
        %v591 = vpop.xlane.xlu0 %590
        %v592 = vmax.f32 %v583, %v588
        %v593 = vmax.f32 %v584, %v591
        %v594 = vsub.f32 %v583, %v592
        %v595 = vsub.f32 %v584, %v593
        %v596 = vmul.f32 %v594, 1.442695
        %v597 = vpow.pop %v596
        %v598 = vmul.f32 %v595, 1.442695
        %v599 = vpow.pop %v598
        %601 = vset.pattern.permute.xlu0 0
        %602 = vperm.xlu0 %601, %v592
        %v603 = vpop.permute.xlu0 %602
        %606 = vset.pattern.permute.xlu0 0
        %607 = vperm.xlu0 %606, %v593
        %v608 = vpop.permute.xlu0 %607
        %v610 = vsub.f32 %v577, %v603
        %v611 = vsub.f32 %v580, %v608
        %v612 = vmul.f32 %v610, 1.442695
        %v613 = vpow.pop %v612
        %v614 = vmul.f32 %v611, 1.442695
        %v615 = vpow.pop %v614
        %v616 = vld [vmem:[#allocation4] sm:$0xff]
        %v617 = vld [vmem:[#allocation4 + $0x8] sm:$0xff]
        %v618 = vmul.f32 %v597, %v616
        %v619 = vmul.f32 %v599, %v617
        %v620 = vsel %vm585, %v613, 0.0
        %621 = vadd.xlane.f32.xlu0 %v620
        %v622 = vpop.xlane.xlu0 %621
        %v623 = vsel %vm585, %v615, 0.0
        %624 = vadd.xlane.f32.xlu0 %v623
        %v625 = vpop.xlane.xlu0 %624
        %v626 = vadd.f32 %v618, %v622
        %v627 = vadd.f32 %v619, %v625
        %vm628 = vcmask 7168
        %629 = vst.msk [vmem:[#allocation4] sm:$0xff] %vm628, %v626
        %630 = vst.msk [vmem:[#allocation4 + $0x8] sm:$0xff] %vm628, %v627
        %v631 = vld [vmem:[#allocation5] sm:$0xff]
        %v632 = vld [vmem:[#allocation5 + $0x8] sm:$0xff]
        %634 = vset.pattern.permute.xlu0 0
        %635 = vperm.xlu0 %634, %v597
        %v636 = vpop.permute.xlu0 %635
        %639 = vset.pattern.permute.xlu0 0
        %640 = vperm.xlu0 %639, %v599
        %v641 = vpop.permute.xlu0 %640
        %v643 = vmul.f32 %v636, %v631
        %v644 = vmul.f32 %v641, %v632
        %v645 = vpack.c.bf16 %v615, %v613
        %647 = vrot.lane.b32.xlu0 %v526, 64
        %v648 = vpop.permute.xlu0 %647
        %v650 = vsel %vm585, %v645, 0
        %vm652 = vcmask 1043456
        %v654 = vsel %vm652, %v648, 0
        %656 = vmatprep.subr.bf16.mxu0 0
        %657 = vmatpush1.bf16.msra.mxu0 %v654
        %658 = vmatprep.subr.bf16.mxu0 0
        %659 = vmatpush1.bf16.msra.mxu0 0
        %660 = vmatprep.subr.bf16.mxu0 0
        %661 = vmatpush1.bf16.msra.mxu0 0
        %662 = vmatprep.subr.bf16.mxu0 0
        %663 = vmatpush1.bf16.msra.mxu0 0
        %664 = vmatprep.subr.bf16.mxu0 0
        %665 = vmatpush1.bf16.msra.mxu0 0
        %666 = vmatprep.subr.bf16.mxu0 0
        %667 = vmatpush1.bf16.msra.mxu0 0
        %668 = vmatprep.subr.bf16.mxu0 0
        %669 = vmatpush1.bf16.msra.mxu0 0
        %670 = vmatprep.subr.bf16.mxu0 0
        %671 = vmatpush1.bf16.msra.mxu0 0
        %672 = vmatprep.subr.bf16.mxu0 0
        %673 = vmatpush1.bf16.msra.mxu0 0
        %674 = vmatprep.subr.bf16.mxu0 0
        %675 = vmatpush1.bf16.msra.mxu0 0
        %676 = vmatprep.subr.bf16.mxu0 0
        %677 = vmatpush1.bf16.msra.mxu0 0
        %678 = vmatprep.subr.bf16.mxu0 0
        %679 = vmatpush1.bf16.msra.mxu0 0
        %680 = vmatprep.subr.bf16.mxu0 0
        %681 = vmatpush1.bf16.msra.mxu0 0
        %682 = vmatprep.subr.bf16.mxu0 0
        %683 = vmatpush1.bf16.msra.mxu0 0
        %684 = vmatprep.subr.bf16.mxu0 0
        %685 = vmatpush1.bf16.msra.mxu0 0
        %686 = vmatprep.subr.bf16.mxu0 0
        %687 = vmatpush1.bf16.msra.mxu0 0
        %688 = vmatprep.mubr.bf16.mxu0 0
        %689 = vmatmul.mubr.bf16.gmra.mrb[0].mxu0 %v650
        %v690 = vpop.f32.mrb[0].mxu0
        %v691 = vadd.f32 0.0, %v690
        %v692 = vpop.f32.mrb[0].mxu0
        %v693 = vpop.f32.mrb[0].mxu0
        %v694 = vadd.f32 0.0, %v693
        %v695 = vpop.f32.mrb[0].mxu0
        %696 = vdwg.mxu0
        %v697 = vadd.f32 %v643, %v691
        %v698 = vadd.f32 %v644, %v694
        %699 = vst.msk [vmem:[#allocation5] sm:$0xff] %vm535, %v697
        %700 = vst.msk [vmem:[#allocation5 + $0x8] sm:$0xff] %vm535, %v698
        %701 = vst.msk [vmem:[#allocation3] sm:$0xff] %vm628, %v592
        %702 = vst.msk [vmem:[#allocation3 + $0x8] sm:$0xff] %vm628, %v593
        %v703 = vld [vmem:[#allocation2] sm:$0xff]
        %705 = vrot.lane.b32.xlu0 %v703, 112
        %v706 = vpop.permute.xlu0 %705
        %707 = vrot.lane.b32.xlu0 %v526, 112
        %v708 = vpop.permute.xlu0 %707
        %v710 = vsel %vm535, %v706, 0
        %v713 = vsel %vm535, %v708, 0
        %715 = vmatprep.subr.bf16.mxu0 0
        %716 = vmatpush1.bf16.xpose.msra.mxu0 %v713
        %717 = vmatprep.subr.bf16.mxu0 0
        %718 = vmatpush1.bf16.xpose.msra.mxu0 0
        %719 = vmatprep.subr.bf16.mxu0 0
        %720 = vmatpush1.bf16.xpose.msra.mxu0 0
        %721 = vmatprep.subr.bf16.mxu0 0
        %722 = vmatpush1.bf16.xpose.msra.mxu0 0
        %723 = vmatprep.subr.bf16.mxu0 0
        %724 = vmatpush1.bf16.xpose.msra.mxu0 0
        %725 = vmatprep.subr.bf16.mxu0 0
        %726 = vmatpush1.bf16.xpose.msra.mxu0 0
        %727 = vmatprep.subr.bf16.mxu0 0
        %728 = vmatpush1.bf16.xpose.msra.mxu0 0
        %729 = vmatprep.subr.bf16.mxu0 0
        %730 = vmatpush1.bf16.xpose.msra.mxu0 0
        %731 = vmatprep.subr.bf16.mxu0 0
        %732 = vmatpush1.bf16.xpose.msra.mxu0 0
        %733 = vmatprep.subr.bf16.mxu0 0
        %734 = vmatpush1.bf16.xpose.msra.mxu0 0
        %735 = vmatprep.subr.bf16.mxu0 0
        %736 = vmatpush1.bf16.xpose.msra.mxu0 0
        %737 = vmatprep.subr.bf16.mxu0 0
        %738 = vmatpush1.bf16.xpose.msra.mxu0 0
        %739 = vmatprep.subr.bf16.mxu0 0
        %740 = vmatpush1.bf16.xpose.msra.mxu0 0
        %741 = vmatprep.subr.bf16.mxu0 0
        %742 = vmatpush1.bf16.xpose.msra.mxu0 0
        %743 = vmatprep.subr.bf16.mxu0 0
        %744 = vmatpush1.bf16.xpose.msra.mxu0 0
        %745 = vmatprep.subr.bf16.mxu0 0
        %746 = vmatpush1.bf16.xpose.msra.mxu0 0
        %747 = vmatprep.mubr.bf16.mxu0 0
        %748 = vmatmul.mubr.bf16.gmra.mrb[0].mxu0 %v710
        %v749 = vpop.f32.mrb[0].mxu0
        %v750 = vadd.f32 %v533, %v749
        %v751 = vpop.f32.mrb[0].mxu0
        %v752 = vpop.f32.mrb[0].mxu0
        %v753 = vadd.f32 %v533, %v752
        %v754 = vpop.f32.mrb[0].mxu0
        %755 = vdwg.mxu0
        %s756 = scalar_lea.vmem [#allocation3], 16
        %v757 = vld [vmem:[%s756] sm:$0xff]
        %v758 = vld [vmem:[%s756 + $0x8] sm:$0xff]
        %v759 = vsel %vm585, %v750, -inf
        %760 = vmax.xlane.f32.xlu0 %v759
        %v761 = vpop.xlane.xlu0 %760
        %v762 = vsel %vm585, %v753, -inf
        %763 = vmax.xlane.f32.xlu0 %v762
        %v764 = vpop.xlane.xlu0 %763
        %v765 = vmax.f32 %v757, %v761
        %v766 = vmax.f32 %v758, %v764
        %v767 = vsub.f32 %v757, %v765
        %v768 = vsub.f32 %v758, %v766
        %v769 = vmul.f32 %v767, 1.442695
        %v770 = vpow.pop %v769
        %v771 = vmul.f32 %v768, 1.442695
        %v772 = vpow.pop %v771
        %774 = vset.pattern.permute.xlu0 0
        %775 = vperm.xlu0 %774, %v765
        %v776 = vpop.permute.xlu0 %775
        %779 = vset.pattern.permute.xlu0 0
        %780 = vperm.xlu0 %779, %v766
        %v781 = vpop.permute.xlu0 %780
        %v783 = vsub.f32 %v750, %v776
        %v784 = vsub.f32 %v753, %v781
        %v785 = vmul.f32 %v783, 1.442695
        %v786 = vpow.pop %v785
        %v787 = vmul.f32 %v784, 1.442695
        %v788 = vpow.pop %v787
        %s789 = scalar_lea.vmem [#allocation4], 16
        %v790 = vld [vmem:[%s789] sm:$0xff]
        %v791 = vld [vmem:[%s789 + $0x8] sm:$0xff]
        %v792 = vmul.f32 %v770, %v790
        %v793 = vmul.f32 %v772, %v791
        %v794 = vsel %vm585, %v786, 0.0
        %795 = vadd.xlane.f32.xlu0 %v794
        %v796 = vpop.xlane.xlu0 %795
        %v797 = vsel %vm585, %v788, 0.0
        %798 = vadd.xlane.f32.xlu0 %v797
        %v799 = vpop.xlane.xlu0 %798
        %v800 = vadd.f32 %v792, %v796
        %v801 = vadd.f32 %v793, %v799
        %802 = vst.msk [vmem:[%s789] sm:$0xff] %vm628, %v800
        %803 = vst.msk [vmem:[%s789 + $0x8] sm:$0xff] %vm628, %v801
        %s804 = scalar_lea.vmem [#allocation5], 16
        %v805 = vld [vmem:[%s804] sm:$0xff]
        %v806 = vld [vmem:[%s804 + $0x8] sm:$0xff]
        %808 = vset.pattern.permute.xlu0 0
        %809 = vperm.xlu0 %808, %v770
        %v810 = vpop.permute.xlu0 %809
        %813 = vset.pattern.permute.xlu0 0
        %814 = vperm.xlu0 %813, %v772
        %v815 = vpop.permute.xlu0 %814
        %v817 = vmul.f32 %v810, %v805
        %v818 = vmul.f32 %v815, %v806
        %v819 = vpack.c.bf16 %v788, %v786
        %820 = vrot.lane.b32.xlu0 %v526, 48
        %v821 = vpop.permute.xlu0 %820
        %v823 = vsel %vm585, %v819, 0
        %v826 = vsel %vm652, %v821, 0
        %828 = vmatprep.subr.bf16.mxu0 0
        %829 = vmatpush1.bf16.msra.mxu0 %v826
        %830 = vmatprep.subr.bf16.mxu0 0
        %831 = vmatpush1.bf16.msra.mxu0 0
        %832 = vmatprep.subr.bf16.mxu0 0
        %833 = vmatpush1.bf16.msra.mxu0 0
        %834 = vmatprep.subr.bf16.mxu0 0
        %835 = vmatpush1.bf16.msra.mxu0 0
        %836 = vmatprep.subr.bf16.mxu0 0
        %837 = vmatpush1.bf16.msra.mxu0 0
        %838 = vmatprep.subr.bf16.mxu0 0
        %839 = vmatpush1.bf16.msra.mxu0 0
        %840 = vmatprep.subr.bf16.mxu0 0
        %841 = vmatpush1.bf16.msra.mxu0 0
        %842 = vmatprep.subr.bf16.mxu0 0
        %843 = vmatpush1.bf16.msra.mxu0 0
        %844 = vmatprep.subr.bf16.mxu0 0
        %845 = vmatpush1.bf16.msra.mxu0 0
        %846 = vmatprep.subr.bf16.mxu0 0
        %847 = vmatpush1.bf16.msra.mxu0 0
        %848 = vmatprep.subr.bf16.mxu0 0
        %849 = vmatpush1.bf16.msra.mxu0 0
        %850 = vmatprep.subr.bf16.mxu0 0
        %851 = vmatpush1.bf16.msra.mxu0 0
        %852 = vmatprep.subr.bf16.mxu0 0
        %853 = vmatpush1.bf16.msra.mxu0 0
        %854 = vmatprep.subr.bf16.mxu0 0
        %855 = vmatpush1.bf16.msra.mxu0 0
        %856 = vmatprep.subr.bf16.mxu0 0
        %857 = vmatpush1.bf16.msra.mxu0 0
        %858 = vmatprep.subr.bf16.mxu0 0
        %859 = vmatpush1.bf16.msra.mxu0 0
        %860 = vmatprep.mubr.bf16.mxu0 0
        %861 = vmatmul.mubr.bf16.gmra.mrb[0].mxu0 %v823
        %v862 = vpop.f32.mrb[0].mxu0
        %v863 = vadd.f32 0.0, %v862
        %v864 = vpop.f32.mrb[0].mxu0
        %v865 = vpop.f32.mrb[0].mxu0
        %v866 = vadd.f32 0.0, %v865
        %v867 = vpop.f32.mrb[0].mxu0
        %868 = vdwg.mxu0
        %v869 = vadd.f32 %v817, %v863
        %v870 = vadd.f32 %v818, %v866
        %871 = vst.msk [vmem:[%s804] sm:$0xff] %vm535, %v869
        %872 = vst.msk [vmem:[%s804 + $0x8] sm:$0xff] %vm535, %v870
        %873 = vst.msk [vmem:[%s756] sm:$0xff] %vm628, %v765
        %874 = vst.msk [vmem:[%s756 + $0x8] sm:$0xff] %vm628, %v766
        %v875 = vld [vmem:[#allocation2] sm:$0xff]
        %877 = vrot.lane.b32.xlu0 %v875, 96
        %v878 = vpop.permute.xlu0 %877
        %879 = vrot.lane.b32.xlu0 %v526, 96
        %v880 = vpop.permute.xlu0 %879
        %v882 = vsel %vm535, %v878, 0
        %v885 = vsel %vm535, %v880, 0
        %887 = vmatprep.subr.bf16.mxu0 0
        %888 = vmatpush1.bf16.xpose.msra.mxu0 %v885
        %889 = vmatprep.subr.bf16.mxu0 0
        %890 = vmatpush1.bf16.xpose.msra.mxu0 0
        %891 = vmatprep.subr.bf16.mxu0 0
        %892 = vmatpush1.bf16.xpose.msra.mxu0 0
        %893 = vmatprep.subr.bf16.mxu0 0
        %894 = vmatpush1.bf16.xpose.msra.mxu0 0
        %895 = vmatprep.subr.bf16.mxu0 0
        %896 = vmatpush1.bf16.xpose.msra.mxu0 0
        %897 = vmatprep.subr.bf16.mxu0 0
        %898 = vmatpush1.bf16.xpose.msra.mxu0 0
        %899 = vmatprep.subr.bf16.mxu0 0
        %900 = vmatpush1.bf16.xpose.msra.mxu0 0
        %901 = vmatprep.subr.bf16.mxu0 0
        %902 = vmatpush1.bf16.xpose.msra.mxu0 0
        %903 = vmatprep.subr.bf16.mxu0 0
        %904 = vmatpush1.bf16.xpose.msra.mxu0 0
        %905 = vmatprep.subr.bf16.mxu0 0
        %906 = vmatpush1.bf16.xpose.msra.mxu0 0
        %907 = vmatprep.subr.bf16.mxu0 0
        %908 = vmatpush1.bf16.xpose.msra.mxu0 0
        %909 = vmatprep.subr.bf16.mxu0 0
        %910 = vmatpush1.bf16.xpose.msra.mxu0 0
        %911 = vmatprep.subr.bf16.mxu0 0
        %912 = vmatpush1.bf16.xpose.msra.mxu0 0
        %913 = vmatprep.subr.bf16.mxu0 0
        %914 = vmatpush1.bf16.xpose.msra.mxu0 0
        %915 = vmatprep.subr.bf16.mxu0 0
        %916 = vmatpush1.bf16.xpose.msra.mxu0 0
        %917 = vmatprep.subr.bf16.mxu0 0
        %918 = vmatpush1.bf16.xpose.msra.mxu0 0
        %919 = vmatprep.mubr.bf16.mxu0 0
        %920 = vmatmul.mubr.bf16.gmra.mrb[0].mxu0 %v882
        %v921 = vpop.f32.mrb[0].mxu0
        %v922 = vadd.f32 %v533, %v921
        %v923 = vpop.f32.mrb[0].mxu0
        %v924 = vpop.f32.mrb[0].mxu0
        %v925 = vadd.f32 %v533, %v924
        %v926 = vpop.f32.mrb[0].mxu0
        %927 = vdwg.mxu0
        %s928 = scalar_lea.vmem [#allocation3], 32
        %v929 = vld [vmem:[%s928] sm:$0xff]
        %v930 = vld [vmem:[%s928 + $0x8] sm:$0xff]
        %v931 = vsel %vm585, %v922, -inf
        %932 = vmax.xlane.f32.xlu0 %v931
        %v933 = vpop.xlane.xlu0 %932
        %v934 = vsel %vm585, %v925, -inf
        %935 = vmax.xlane.f32.xlu0 %v934
        %v936 = vpop.xlane.xlu0 %935
        %v937 = vmax.f32 %v929, %v933
        %v938 = vmax.f32 %v930, %v936
        %v939 = vsub.f32 %v929, %v937
        %v940 = vsub.f32 %v930, %v938
        %v941 = vmul.f32 %v939, 1.442695
        %v942 = vpow.pop %v941
        %v943 = vmul.f32 %v940, 1.442695
        %v944 = vpow.pop %v943
        %946 = vset.pattern.permute.xlu0 0
        %947 = vperm.xlu0 %946, %v937
        %v948 = vpop.permute.xlu0 %947
        %951 = vset.pattern.permute.xlu0 0
        %952 = vperm.xlu0 %951, %v938
        %v953 = vpop.permute.xlu0 %952
        %v955 = vsub.f32 %v922, %v948
        %v956 = vsub.f32 %v925, %v953
        %v957 = vmul.f32 %v955, 1.442695
        %v958 = vpow.pop %v957
        %v959 = vmul.f32 %v956, 1.442695
        %v960 = vpow.pop %v959
        %s961 = scalar_lea.vmem [#allocation4], 32
        %v962 = vld [vmem:[%s961] sm:$0xff]
        %v963 = vld [vmem:[%s961 + $0x8] sm:$0xff]
        %v964 = vmul.f32 %v942, %v962
        %v965 = vmul.f32 %v944, %v963
        %v966 = vsel %vm585, %v958, 0.0
        %967 = vadd.xlane.f32.xlu0 %v966
        %v968 = vpop.xlane.xlu0 %967
        %v969 = vsel %vm585, %v960, 0.0
        %970 = vadd.xlane.f32.xlu0 %v969
        %v971 = vpop.xlane.xlu0 %970
        %v972 = vadd.f32 %v964, %v968
        %v973 = vadd.f32 %v965, %v971
        %974 = vst.msk [vmem:[%s961] sm:$0xff] %vm628, %v972
        %975 = vst.msk [vmem:[%s961 + $0x8] sm:$0xff] %vm628, %v973
        %s976 = scalar_lea.vmem [#allocation5], 32
        %v977 = vld [vmem:[%s976] sm:$0xff]
        %v978 = vld [vmem:[%s976 + $0x8] sm:$0xff]
        %980 = vset.pattern.permute.xlu0 0
        %981 = vperm.xlu0 %980, %v942
        %v982 = vpop.permute.xlu0 %981
        %985 = vset.pattern.permute.xlu0 0
        %986 = vperm.xlu0 %985, %v944
        %v987 = vpop.permute.xlu0 %986
        %v989 = vmul.f32 %v982, %v977
        %v990 = vmul.f32 %v987, %v978
        %v991 = vpack.c.bf16 %v960, %v958
        %992 = vrot.lane.b32.xlu0 %v526, 32
        %v993 = vpop.permute.xlu0 %992
        %v995 = vsel %vm585, %v991, 0
        %v998 = vsel %vm652, %v993, 0
        %1000 = vmatprep.subr.bf16.mxu0 0
        %1001 = vmatpush1.bf16.msra.mxu0 %v998
        %1002 = vmatprep.subr.bf16.mxu0 0
        %1003 = vmatpush1.bf16.msra.mxu0 0
        %1004 = vmatprep.subr.bf16.mxu0 0
        %1005 = vmatpush1.bf16.msra.mxu0 0
        %1006 = vmatprep.subr.bf16.mxu0 0
        %1007 = vmatpush1.bf16.msra.mxu0 0
        %1008 = vmatprep.subr.bf16.mxu0 0
        %1009 = vmatpush1.bf16.msra.mxu0 0
        %1010 = vmatprep.subr.bf16.mxu0 0
        %1011 = vmatpush1.bf16.msra.mxu0 0
        %1012 = vmatprep.subr.bf16.mxu0 0
        %1013 = vmatpush1.bf16.msra.mxu0 0
        %1014 = vmatprep.subr.bf16.mxu0 0
        %1015 = vmatpush1.bf16.msra.mxu0 0
        %1016 = vmatprep.subr.bf16.mxu0 0
        %1017 = vmatpush1.bf16.msra.mxu0 0
        %1018 = vmatprep.subr.bf16.mxu0 0
        %1019 = vmatpush1.bf16.msra.mxu0 0
        %1020 = vmatprep.subr.bf16.mxu0 0
        %1021 = vmatpush1.bf16.msra.mxu0 0
        %1022 = vmatprep.subr.bf16.mxu0 0
        %1023 = vmatpush1.bf16.msra.mxu0 0
        %1024 = vmatprep.subr.bf16.mxu0 0
        %1025 = vmatpush1.bf16.msra.mxu0 0
        %1026 = vmatprep.subr.bf16.mxu0 0
        %1027 = vmatpush1.bf16.msra.mxu0 0
        %1028 = vmatprep.subr.bf16.mxu0 0
        %1029 = vmatpush1.bf16.msra.mxu0 0
        %1030 = vmatprep.subr.bf16.mxu0 0
        %1031 = vmatpush1.bf16.msra.mxu0 0
        %1032 = vmatprep.mubr.bf16.mxu0 0
        %1033 = vmatmul.mubr.bf16.gmra.mrb[0].mxu0 %v995
        %v1034 = vpop.f32.mrb[0].mxu0
        %v1035 = vadd.f32 0.0, %v1034
        %v1036 = vpop.f32.mrb[0].mxu0
        %v1037 = vpop.f32.mrb[0].mxu0
        %v1038 = vadd.f32 0.0, %v1037
        %v1039 = vpop.f32.mrb[0].mxu0
        %1040 = vdwg.mxu0
        %v1041 = vadd.f32 %v989, %v1035
        %v1042 = vadd.f32 %v990, %v1038
        %1043 = vst.msk [vmem:[%s976] sm:$0xff] %vm535, %v1041
        %1044 = vst.msk [vmem:[%s976 + $0x8] sm:$0xff] %vm535, %v1042
        %1045 = vst.msk [vmem:[%s928] sm:$0xff] %vm628, %v937
        %1046 = vst.msk [vmem:[%s928 + $0x8] sm:$0xff] %vm628, %v938
        %v1047 = vld [vmem:[#allocation2] sm:$0xff]
        %1049 = vrot.lane.b32.xlu0 %v1047, 80
        %v1050 = vpop.permute.xlu0 %1049
        %1051 = vrot.lane.b32.xlu0 %v526, 80
        %v1052 = vpop.permute.xlu0 %1051
        %v1054 = vsel %vm535, %v1050, 0
        %v1057 = vsel %vm535, %v1052, 0
        %1059 = vmatprep.subr.bf16.mxu0 0
        %1060 = vmatpush1.bf16.xpose.msra.mxu0 %v1057
        %1061 = vmatprep.subr.bf16.mxu0 0
        %1062 = vmatpush1.bf16.xpose.msra.mxu0 0
        %1063 = vmatprep.subr.bf16.mxu0 0
        %1064 = vmatpush1.bf16.xpose.msra.mxu0 0
        %1065 = vmatprep.subr.bf16.mxu0 0
        %1066 = vmatpush1.bf16.xpose.msra.mxu0 0
        %1067 = vmatprep.subr.bf16.mxu0 0
        %1068 = vmatpush1.bf16.xpose.msra.mxu0 0
        %1069 = vmatprep.subr.bf16.mxu0 0
        %1070 = vmatpush1.bf16.xpose.msra.mxu0 0
        %1071 = vmatprep.subr.bf16.mxu0 0
        %1072 = vmatpush1.bf16.xpose.msra.mxu0 0
        %1073 = vmatprep.subr.bf16.mxu0 0
        %1074 = vmatpush1.bf16.xpose.msra.mxu0 0
        %1075 = vmatprep.subr.bf16.mxu0 0
        %1076 = vmatpush1.bf16.xpose.msra.mxu0 0
        %1077 = vmatprep.subr.bf16.mxu0 0
        %1078 = vmatpush1.bf16.xpose.msra.mxu0 0
        %1079 = vmatprep.subr.bf16.mxu0 0
        %1080 = vmatpush1.bf16.xpose.msra.mxu0 0
        %1081 = vmatprep.subr.bf16.mxu0 0
        %1082 = vmatpush1.bf16.xpose.msra.mxu0 0
        %1083 = vmatprep.subr.bf16.mxu0 0
        %1084 = vmatpush1.bf16.xpose.msra.mxu0 0
        %1085 = vmatprep.subr.bf16.mxu0 0
        %1086 = vmatpush1.bf16.xpose.msra.mxu0 0
        %1087 = vmatprep.subr.bf16.mxu0 0
        %1088 = vmatpush1.bf16.xpose.msra.mxu0 0
        %1089 = vmatprep.subr.bf16.mxu0 0
        %1090 = vmatpush1.bf16.xpose.msra.mxu0 0
        %1091 = vmatprep.mubr.bf16.mxu0 0
        %1092 = vmatmul.mubr.bf16.gmra.mrb[0].mxu0 %v1054
        %v1093 = vpop.f32.mrb[0].mxu0
        %v1094 = vadd.f32 %v533, %v1093
        %v1095 = vpop.f32.mrb[0].mxu0
        %v1096 = vpop.f32.mrb[0].mxu0
        %v1097 = vadd.f32 %v533, %v1096
        %v1098 = vpop.f32.mrb[0].mxu0
        %1099 = vdwg.mxu0
        %s1100 = scalar_lea.vmem [#allocation3], 48
        %v1101 = vld [vmem:[%s1100] sm:$0xff]
        %v1102 = vld [vmem:[%s1100 + $0x8] sm:$0xff]
        %v1103 = vsel %vm585, %v1094, -inf
        %1104 = vmax.xlane.f32.xlu0 %v1103
        %v1105 = vpop.xlane.xlu0 %1104
        %v1106 = vsel %vm585, %v1097, -inf
        %1107 = vmax.xlane.f32.xlu0 %v1106
        %v1108 = vpop.xlane.xlu0 %1107
        %v1109 = vmax.f32 %v1101, %v1105
        %v1110 = vmax.f32 %v1102, %v1108
        %v1111 = vsub.f32 %v1101, %v1109
        %v1112 = vsub.f32 %v1102, %v1110
        %v1113 = vmul.f32 %v1111, 1.442695
        %v1114 = vpow.pop %v1113
        %v1115 = vmul.f32 %v1112, 1.442695
        %v1116 = vpow.pop %v1115
        %1118 = vset.pattern.permute.xlu0 0
        %1119 = vperm.xlu0 %1118, %v1109
        %v1120 = vpop.permute.xlu0 %1119
        %1123 = vset.pattern.permute.xlu0 0
        %1124 = vperm.xlu0 %1123, %v1110
        %v1125 = vpop.permute.xlu0 %1124
        %v1127 = vsub.f32 %v1094, %v1120
        %v1128 = vsub.f32 %v1097, %v1125
        %v1129 = vmul.f32 %v1127, 1.442695
        %v1130 = vpow.pop %v1129
        %v1131 = vmul.f32 %v1128, 1.442695
        %v1132 = vpow.pop %v1131
        %s1133 = scalar_lea.vmem [#allocation4], 48
        %v1134 = vld [vmem:[%s1133] sm:$0xff]
        %v1135 = vld [vmem:[%s1133 + $0x8] sm:$0xff]
        %v1136 = vmul.f32 %v1114, %v1134
        %v1137 = vmul.f32 %v1116, %v1135
        %v1138 = vsel %vm585, %v1130, 0.0
        %1139 = vadd.xlane.f32.xlu0 %v1138
        %v1140 = vpop.xlane.xlu0 %1139
        %v1141 = vsel %vm585, %v1132, 0.0
        %1142 = vadd.xlane.f32.xlu0 %v1141
        %v1143 = vpop.xlane.xlu0 %1142
        %v1144 = vadd.f32 %v1136, %v1140
        %v1145 = vadd.f32 %v1137, %v1143
        %1146 = vst.msk [vmem:[%s1133] sm:$0xff] %vm628, %v1144
        %1147 = vst.msk [vmem:[%s1133 + $0x8] sm:$0xff] %vm628, %v1145
        %s1148 = scalar_lea.vmem [#allocation5], 48
        %v1149 = vld [vmem:[%s1148] sm:$0xff]
        %v1150 = vld [vmem:[%s1148 + $0x8] sm:$0xff]
        %1152 = vset.pattern.permute.xlu0 0
        %1153 = vperm.xlu0 %1152, %v1114
        %v1154 = vpop.permute.xlu0 %1153
        %1157 = vset.pattern.permute.xlu0 0
        %1158 = vperm.xlu0 %1157, %v1116
        %v1159 = vpop.permute.xlu0 %1158
        %v1161 = vmul.f32 %v1154, %v1149
        %v1162 = vmul.f32 %v1159, %v1150
        %v1163 = vpack.c.bf16 %v1132, %v1130
        %1164 = vrot.lane.b32.xlu0 %v526, 16
        %v1165 = vpop.permute.xlu0 %1164
        %v1167 = vsel %vm585, %v1163, 0
        %v1170 = vsel %vm652, %v1165, 0
        %1172 = vmatprep.subr.bf16.mxu0 0
        %1173 = vmatpush1.bf16.msra.mxu0 %v1170
        %1174 = vmatprep.subr.bf16.mxu0 0
        %1175 = vmatpush1.bf16.msra.mxu0 0
        %1176 = vmatprep.subr.bf16.mxu0 0
        %1177 = vmatpush1.bf16.msra.mxu0 0
        %1178 = vmatprep.subr.bf16.mxu0 0
        %1179 = vmatpush1.bf16.msra.mxu0 0
        %1180 = vmatprep.subr.bf16.mxu0 0
        %1181 = vmatpush1.bf16.msra.mxu0 0
        %1182 = vmatprep.subr.bf16.mxu0 0
        %1183 = vmatpush1.bf16.msra.mxu0 0
        %1184 = vmatprep.subr.bf16.mxu0 0
        %1185 = vmatpush1.bf16.msra.mxu0 0
        %1186 = vmatprep.subr.bf16.mxu0 0
        %1187 = vmatpush1.bf16.msra.mxu0 0
        %1188 = vmatprep.subr.bf16.mxu0 0
        %1189 = vmatpush1.bf16.msra.mxu0 0
        %1190 = vmatprep.subr.bf16.mxu0 0
        %1191 = vmatpush1.bf16.msra.mxu0 0
        %1192 = vmatprep.subr.bf16.mxu0 0
        %1193 = vmatpush1.bf16.msra.mxu0 0
        %1194 = vmatprep.subr.bf16.mxu0 0
        %1195 = vmatpush1.bf16.msra.mxu0 0
        %1196 = vmatprep.subr.bf16.mxu0 0
        %1197 = vmatpush1.bf16.msra.mxu0 0
        %1198 = vmatprep.subr.bf16.mxu0 0
        %1199 = vmatpush1.bf16.msra.mxu0 0
        %1200 = vmatprep.subr.bf16.mxu0 0
        %1201 = vmatpush1.bf16.msra.mxu0 0
        %1202 = vmatprep.subr.bf16.mxu0 0
        %1203 = vmatpush1.bf16.msra.mxu0 0
        %1204 = vmatprep.mubr.bf16.mxu0 0
        %1205 = vmatmul.mubr.bf16.gmra.mrb[0].mxu0 %v1167
        %v1206 = vpop.f32.mrb[0].mxu0
        %v1207 = vadd.f32 0.0, %v1206
        %v1208 = vpop.f32.mrb[0].mxu0
        %v1209 = vpop.f32.mrb[0].mxu0
        %v1210 = vadd.f32 0.0, %v1209
        %v1211 = vpop.f32.mrb[0].mxu0
        %1212 = vdwg.mxu0
        %v1213 = vadd.f32 %v1161, %v1207
        %v1214 = vadd.f32 %v1162, %v1210
        %1215 = vst.msk [vmem:[%s1148] sm:$0xff] %vm535, %v1213
        %1216 = vst.msk [vmem:[%s1148 + $0x8] sm:$0xff] %vm535, %v1214
        %1217 = vst.msk [vmem:[%s1100] sm:$0xff] %vm628, %v1109
        %1218 = vst.msk [vmem:[%s1100 + $0x8] sm:$0xff] %vm628, %v1110
        %p1219 = scmp.eq.s32.totalorder %s26, 2
        // Predicated region
        $region53: #{attention_forward.1} parent=47 // pred_check
          %p1220 = pneg %p1219
        $region54: #{attention_forward.1} parent=47 // pred_check_branch
          %1222 = sbr.rel (%p1220) target = $region56
        $region55: #{attention_forward.1} parent=47 // pred_region
          %v1223 = vld [vmem:[#allocation4] sm:$0xff]
          %v1224 = vld [vmem:[#allocation4 + $0x8] sm:$0xff]
          %v1225 = vrcp.pop %v1223
          %v1226 = vrcp.pop %v1224
          %v1227 = vld [vmem:[#allocation5] sm:$0xff]
          %v1228 = vld [vmem:[#allocation5 + $0x8] sm:$0xff]
          %1230 = vset.pattern.permute.xlu0 0
          %1231 = vperm.xlu0 %1230, %v1225
          %v1232 = vpop.permute.xlu0 %1231
          %1235 = vset.pattern.permute.xlu0 0
          %1236 = vperm.xlu0 %1235, %v1226
          %v1237 = vpop.permute.xlu0 %1236
          %v1239 = vmul.f32 %v1227, %v1232
          %v1240 = vmul.f32 %v1228, %v1237
          %1241 = vst.msk [vmem:[#allocation6] sm:$0xff] %vm535, %v1239
          %1242 = vst.msk [vmem:[#allocation6 + $0x8] sm:$0xff] %vm535, %v1240
          %v1243 = vld [vmem:[%s789] sm:$0xff]
          %v1244 = vld [vmem:[%s789 + $0x8] sm:$0xff]
          %v1245 = vrcp.pop %v1243
          %v1246 = vrcp.pop %v1244
          %v1247 = vld [vmem:[%s804] sm:$0xff]
          %v1248 = vld [vmem:[%s804 + $0x8] sm:$0xff]
          %1250 = vset.pattern.permute.xlu0 0
          %1251 = vperm.xlu0 %1250, %v1245
          %v1252 = vpop.permute.xlu0 %1251
          %1255 = vset.pattern.permute.xlu0 0
          %1256 = vperm.xlu0 %1255, %v1246
          %v1257 = vpop.permute.xlu0 %1256
          %v1259 = vmul.f32 %v1247, %v1252
          %v1260 = vmul.f32 %v1248, %v1257
          %1263 = vrot.lane.b32.xlu0 %v1259, 16
          %v1264 = vpop.permute.xlu0 %1263
          %1265 = vrot.lane.b32.xlu0 %v1260, 16
          %v1266 = vpop.permute.xlu0 %1265
          %vm1269 = vcmask 261248
          %1270 = vst.msk [vmem:[#allocation6] sm:$0xff] %vm1269, %v1264
          %1271 = vst.msk [vmem:[#allocation6 + $0x8] sm:$0xff] %vm1269, %v1266
          %v1272 = vld [vmem:[%s961] sm:$0xff]
          %v1273 = vld [vmem:[%s961 + $0x8] sm:$0xff]
          %v1274 = vrcp.pop %v1272
          %v1275 = vrcp.pop %v1273
          %v1276 = vld [vmem:[%s976] sm:$0xff]
          %v1277 = vld [vmem:[%s976 + $0x8] sm:$0xff]
          %1279 = vset.pattern.permute.xlu0 0
          %1280 = vperm.xlu0 %1279, %v1274
          %v1281 = vpop.permute.xlu0 %1280
          %1284 = vset.pattern.permute.xlu0 0
          %1285 = vperm.xlu0 %1284, %v1275
          %v1286 = vpop.permute.xlu0 %1285
          %v1288 = vmul.f32 %v1276, %v1281
          %v1289 = vmul.f32 %v1277, %v1286
          %1292 = vrot.lane.b32.xlu0 %v1288, 32
          %v1293 = vpop.permute.xlu0 %1292
          %1294 = vrot.lane.b32.xlu0 %v1289, 32
          %v1295 = vpop.permute.xlu0 %1294
          %vm1298 = vcmask 392448
          %1299 = vst.msk [vmem:[#allocation6] sm:$0xff] %vm1298, %v1293
          %1300 = vst.msk [vmem:[#allocation6 + $0x8] sm:$0xff] %vm1298, %v1295
          %v1301 = vld [vmem:[%s1133] sm:$0xff]
          %v1302 = vld [vmem:[%s1133 + $0x8] sm:$0xff]
          %v1303 = vrcp.pop %v1301
          %v1304 = vrcp.pop %v1302
          %v1305 = vld [vmem:[%s1148] sm:$0xff]
          %v1306 = vld [vmem:[%s1148 + $0x8] sm:$0xff]
          %1308 = vset.pattern.permute.xlu0 0
          %1309 = vperm.xlu0 %1308, %v1303
          %v1310 = vpop.permute.xlu0 %1309
          %1313 = vset.pattern.permute.xlu0 0
          %1314 = vperm.xlu0 %1313, %v1304
          %v1315 = vpop.permute.xlu0 %1314
          %v1317 = vmul.f32 %v1305, %v1310
          %v1318 = vmul.f32 %v1306, %v1315
          %1321 = vrot.lane.b32.xlu0 %v1317, 48
          %v1322 = vpop.permute.xlu0 %1321
          %1323 = vrot.lane.b32.xlu0 %v1318, 48
          %v1324 = vpop.permute.xlu0 %1323
          %vm1327 = vcmask 523648
          %1328 = vst.msk [vmem:[#allocation6] sm:$0xff] %vm1327, %v1322
          %1329 = vst.msk [vmem:[#allocation6 + $0x8] sm:$0xff] %vm1327, %v1324
          %v1330 = vld [vmem:[#allocation6] sm:$0xff]
          %v1331 = vld [vmem:[#allocation6 + $0x8] sm:$0xff]
          %v1332 = vpack.c.bf16 %v1331, %v1330
          %v1333 = vld [vmem:[%s5] sm:$0xf]
          %v1334 = vld [vmem:[%s5 + $0x4] sm:$0xf]
          %v1335 = vld [vmem:[%s5 + $0x8] sm:$0xf]
          %v1336 = vld [vmem:[%s5 + $0xc] sm:$0xf]
          %v1337 = vld [vmem:[%s5 + $0x10] sm:$0xf]
          %v1338 = vld [vmem:[%s5 + $0x14] sm:$0xf]
          %v1339 = vld [vmem:[%s5 + $0x18] sm:$0xf]
          %v1340 = vld [vmem:[%s5 + $0x1c] sm:$0xf]
          %v1341 = vld [vmem:[%s6] sm:$0x1]
          %v1343 = vlaneseq
          %v1344 = vshrl.u32 %v1343, 7
          %v1345 = vsub.s32 0, %v1344
          %v1346 = vrot.slane %v1341, %v1345
          %v1356 = vunpack.c.l.b16 %v1333
          %v1357 = vunpack.c.l.b16 %v1334
          %v1358 = vunpack.c.l.b16 %v1335
          %v1359 = vunpack.c.l.b16 %v1336
          %v1360 = vunpack.c.l.b16 %v1337
          %v1361 = vunpack.c.l.b16 %v1338
          %v1362 = vunpack.c.l.b16 %v1339
          %v1363 = vunpack.c.l.b16 %v1340
          %v1364 = vpack.c.b16 %v1357, %v1356
          %v1365 = vpack.c.b16 %v1359, %v1358
          %v1366 = vpack.c.b16 %v1361, %v1360
          %v1367 = vpack.c.b16 %v1363, %v1362
          %v1373 = vsel %vm482, %v1332, 0
          %1375 = vmatprep.subr.bf16.mxu0 0
          %1376 = vmatpush1.bf16.msra.mxu0 %v1364
          %1377 = vmatprep.subr.bf16.mxu0 0
          %1378 = vmatpush1.bf16.msra.mxu0 %v1365
          %1379 = vmatprep.subr.bf16.mxu0 0
          %1380 = vmatpush1.bf16.msra.mxu0 %v1366
          %1381 = vmatprep.subr.bf16.mxu0 0
          %1382 = vmatpush1.bf16.msra.mxu0 %v1367
          %1383 = vmatprep.subr.bf16.mxu0 0
          %1384 = vmatpush1.bf16.msra.mxu0 0
          %1385 = vmatprep.subr.bf16.mxu0 0
          %1386 = vmatpush1.bf16.msra.mxu0 0
          %1387 = vmatprep.subr.bf16.mxu0 0
          %1388 = vmatpush1.bf16.msra.mxu0 0
          %1389 = vmatprep.subr.bf16.mxu0 0
          %1390 = vmatpush1.bf16.msra.mxu0 0
          %1391 = vmatprep.subr.bf16.mxu0 0
          %1392 = vmatpush1.bf16.msra.mxu0 0
          %1393 = vmatprep.subr.bf16.mxu0 0
          %1394 = vmatpush1.bf16.msra.mxu0 0
          %1395 = vmatprep.subr.bf16.mxu0 0
          %1396 = vmatpush1.bf16.msra.mxu0 0
          %1397 = vmatprep.subr.bf16.mxu0 0
          %1398 = vmatpush1.bf16.msra.mxu0 0
          %1399 = vmatprep.subr.bf16.mxu0 0
          %1400 = vmatpush1.bf16.msra.mxu0 0
          %1401 = vmatprep.subr.bf16.mxu0 0
          %1402 = vmatpush1.bf16.msra.mxu0 0
          %1403 = vmatprep.subr.bf16.mxu0 0
          %1404 = vmatpush1.bf16.msra.mxu0 0
          %1405 = vmatprep.subr.bf16.mxu0 0
          %1406 = vmatpush1.bf16.msra.mxu0 0
          %1407 = vmatprep.mubr.bf16.mxu0 0
          %1408 = vmatmul.mubr.bf16.gmra.mrb[0].mxu0 %v1373
          %v1409 = vpop.f32.mrb[0].mxu0
          %v1410 = vadd.f32 %v1346, %v1409
          %v1411 = vpop.f32.mrb[0].mxu0
          %v1412 = vpop.f32.mrb[0].mxu0
          %v1413 = vadd.f32 %v1346, %v1412
          %v1414 = vpop.f32.mrb[0].mxu0
          %1415 = vdwg.mxu0
          %vm1416 = vcmask 261120
          %1417 = vst.msk [vmem:[%s327] sm:$0xff] %vm1416, %v1410
          %1418 = vst.msk [vmem:[%s327 + $0x8] sm:$0xff] %vm1416, %v1413
        $region56: #{attention_forward.1} parent=47 // pred_fallthru
          _
        %s1419 = sand.u32 %s207, 1
        %s1420 = scalar_lea.sflag [#allocation8], %s1419
        %s1421 = sand.u32 %s207, 1
        %s1422 = smul.addr %s1421, 16
        %s1423 = scalar_lea.vmem [#allocation7], %s1422
        // Predicated region
        $region57: #{attention_forward.1} parent=47 // pred_check
          %p1424 = pneg %p217
        $region58: #{attention_forward.1} parent=47 // pred_check_branch
          %1426 = sbr.rel (%p1424) target = $region60
        $region59: #{attention_forward.1} parent=47 // pred_region
          %s1428 = ssub.s32 256, 256
          %1429 = vsyncadd %s1420, %s1428
          %s1430 = smul.addr %s25, 2
          %s1431 = smul.addr %s1430, 128
          %s1432 = scalar_lea.hbm %s7, %s1431
          %s1433 = sshll.u32 %s1423, 4
          %s1434 = int_to_ptr.vmem [resolvable:$true] %s1433
          %1439 = dma.vmem_to_hbm [thread:$0]  %s1434, 256, %s1432, %s1420, 128, 128, 8
        $region60: #{attention_forward.1} parent=47 // pred_fallthru
          _
      $region48: #{attention_forward.1} parent=5 // pred_fallthru
        _
      %p1440 = scmp.le.s32.totalorder 2, %s16
      // Predicated region
      $region61: #{attention_forward.1} parent=5 // pred_check
        %p1441 = pneg %p1440
      $region62: #{attention_forward.1} parent=5 // pred_check_branch
        %1443 = sbr.rel (%p1441) target = $region64
      $region63: #{attention_forward.1} parent=5 // pred_region
        %s1444 = ssub.s32 %s16, 2
        // Predicated region
        $region65: #{attention_forward.1} parent=63 // pred_check
          %p1445 = pneg %p223
        $region66: #{attention_forward.1} parent=63 // pred_check_branch
          %1447 = sbr.rel (%p1445) target = $region68
        $region67: #{attention_forward.1} parent=63 // pred_region
          %s1448 = sand.u32 %s208, 1
          %s1449 = scalar_lea.sflag [#allocation8], %s1448
          %s1450 = sand.u32 %s208, 1
          %s1451 = smul.addr %s1450, 16
          %s1452 = scalar_lea.vmem [#allocation7], %s1451
          %1453 = dma.done %s1449, 256
        $region68: #{attention_forward.1} parent=63 // pred_fallthru
          _
      $region64: #{attention_forward.1} parent=5 // pred_fallthru
        _
    $region6: #{attention_forward.1} parent=1 // loop_footer
      %s20 = sadd.s32 1, %s16
    $region7: #{attention_forward.1} parent=1 // loop_footer_branch
      %15 = sbr.rel target = $region3
    $region8: #{attention_forward.1} parent=1 // loop_exit
      _
    %1454 = vsyncpa [#allocation8], 1
    %s1455 = scalar_lea.sflag [#allocation8], 1
    %1456 = vsyncpa %s1455, 1

</llo_original>
